<compile_context>
chip_gen: v7x
topology: tpu7x:2x2x1
jax: 0.10.0
libtpu: 0.0.40
codegen_flags: <defaults>
</compile_context>

<pallas_src>
import jax
import jax.numpy as jnp
from jax import lax
from jax.experimental import pallas as pl
from jax.experimental.pallas import tpu as pltpu


def bilstm_kernel(x_ref, wih_ref, whh_ref, b_ref, out_ref, xg_ref):
    """Fused bidirectional LSTM.

    x_ref   : (T*Bp, D)   time-major input, batch padded to Bp (multiple of 8)
    wih_ref : (D, 8H)     input->gates weights, gate-group interleaved layout
                          [i_f i_b | f_f f_b | g_f g_b | o_f o_b]
    whh_ref : (2H, 8H)    block-diagonal recurrent weights, same column layout
    b_ref   : (1, 8H)     folded biases (b_ih + b_hh), same layout
    out_ref : (T, Bp, 2H) [:, :, :H] forward dir, [:, :, H:] backward dir
    xg_ref  : (T*Bp, 8H)  VMEM scratch holding the input projection
    """
    T, Bp, H2 = out_ref.shape
    H = H2 // 2
    G = 8 * H

    # Hot path 1: one lane-dense MXU matmul for BOTH directions' input gates.
    xg_ref[...] = (
        jnp.dot(x_ref[...], wih_ref[...], preferred_element_type=jnp.float32)
        + b_ref[...])

    whh = whh_ref[...]  # loop-invariant recurrent weights, hoisted

    # Lane mask selecting the forward half of every 2H-wide gate group
    # (built once; forward gates come from timestep t, backward from T-1-t).
    col = lax.broadcasted_iota(jnp.int32, (Bp, G), 1)
    fwd_mask = (col % (2 * H)) < H

    h0 = jnp.zeros((Bp, 2 * H), jnp.float32)   # packed [h_fwd | h_bwd]
    c0 = jnp.zeros((Bp, 2 * H), jnp.float32)   # packed [c_fwd | c_bwd]

    # Hot path 2: single recurrence advancing BOTH directions per iteration so
    # the two independent chains overlap on MXU / EUP / VPU.
    def body(t, carry):
        h, c = carry
        rt = T - 1 - t

        xg_t = xg_ref[pl.ds(pl.multiple_of(t * Bp, Bp), Bp), :]
        xg_r = xg_ref[pl.ds(pl.multiple_of(rt * Bp, Bp), Bp), :]

        # One (Bp, 2H) x (2H, 8H) matmul covers both directions (block-diag).
        gates = jnp.where(fwd_mask, xg_t, xg_r) + jnp.dot(
            h, whh, preferred_element_type=jnp.float32)        # (Bp, 8H)

        # PyTorch gate order i, f, g, o; each slice is a packed [fwd | bwd] pair.
        i = jax.nn.sigmoid(gates[:, 0 * 2 * H:1 * 2 * H])
        f = jax.nn.sigmoid(gates[:, 1 * 2 * H:2 * 2 * H])
        g = jnp.tanh(gates[:, 2 * 2 * H:3 * 2 * H])
        o = jax.nn.sigmoid(gates[:, 3 * 2 * H:4 * 2 * H])
        c = f * c + i * g
        h = o * jnp.tanh(c)

        out_ref[pl.ds(t, 1), :, 0:H] = h[None, :, 0:H]            # fwd @ t
        out_ref[pl.ds(rt, 1), :, H:2 * H] = h[None, :, H:2 * H]   # bwd @ rt
        return (h, c)

    unroll = True if T <= 32 else 8
    lax.fori_loop(0, T, body, (h0, c0), unroll=unroll)


def _prep_weights(params, H):
    """Re-pack torch-layout LSTM weights into the fused kernel layout."""
    D = params['w_ih_f'].shape[1]

    def gate_major(w, rows):         # (4H, rows) -> (rows, 4, H)
        return w.T.reshape(rows, 4, H)

    # Input->gate weights: (D, 8H), group k = [fwd gate k | bwd gate k].
    wf = gate_major(params['w_ih_f'], D)
    wb = gate_major(params['w_ih_b'], D)
    wih = jnp.concatenate([wf, wb], axis=2).reshape(D, 8 * H)

    # Recurrent weights: block-diagonal (2H, 8H) in the same column layout.
    hf = gate_major(params['w_hh_f'], H)
    hb = gate_major(params['w_hh_b'], H)
    z = jnp.zeros_like(hf)
    whh = jnp.concatenate(
        [jnp.concatenate([hf, z], axis=2),
         jnp.concatenate([z, hb], axis=2)], axis=0).reshape(2 * H, 8 * H)

    # Folded biases, same layout.
    bf = (params['b_ih_f'] + params['b_hh_f']).reshape(4, H)
    bb = (params['b_ih_b'] + params['b_hh_b']).reshape(4, H)
    b = jnp.concatenate([bf, bb], axis=1).reshape(1, 8 * H)
    return wih, whh, b


@jax.jit
def bilstm_block_forward(x, params):
    B, T, D = x.shape
    H = params['w_hh_f'].shape[1]
    Bp = ((B + 7) // 8) * 8          # pad batch to a full sublane tile

    wih, whh, b = _prep_weights(params, H)

    # Glue (cheap XLA ops): pad batch, go time-major, flatten to a 2-D slab
    # so the fused projection is one plain lane-dense MXU matmul.
    x_pad = jnp.pad(x, ((0, Bp - B), (0, 0), (0, 0)))
    x_2d = jnp.transpose(x_pad, (1, 0, 2)).reshape(T * Bp, D)

    vmem_bytes = 4 * (T * Bp * (D + 8 * H + 2 * H)
                      + D * 8 * H + 16 * H * H + 8 * H)
    vmem_limit = int(min(64 * 1024 * 1024,
                         max(16 * 1024 * 1024, 2 * vmem_bytes)))

    out = pl.pallas_call(
        bilstm_kernel,
        out_shape=jax.ShapeDtypeStruct((T, Bp, 2 * H), jnp.float32),
        in_specs=[pl.BlockSpec(memory_space=pltpu.MemorySpace.VMEM)] * 4,
        out_specs=pl.BlockSpec(memory_space=pltpu.MemorySpace.VMEM),
        scratch_shapes=[pltpu.VMEM((T * Bp, 8 * H), jnp.float32)],
        compiler_params=pltpu.CompilerParams(vmem_limit_bytes=vmem_limit),
    )(x_2d, wih, whh, b)

    # (T, Bp, 2H) -> (B, T, 2H), matching torch.nn.LSTM(batch_first=True,
    # bidirectional=True) output ordering [forward | backward].
    return jnp.transpose(out[:, :B, :], (1, 0, 2))


def init_bilstm_params(key, input_size, hidden_size):
    """Deterministic init matching nn.LSTM parameter shapes (uniform(-k, k))."""
    k = 1.0 / (hidden_size ** 0.5)
    names = ['w_ih_f', 'w_hh_f', 'b_ih_f', 'b_hh_f',
             'w_ih_b', 'w_hh_b', 'b_ih_b', 'b_hh_b']
    shapes = [(4 * hidden_size, input_size), (4 * hidden_size, hidden_size),
              (4 * hidden_size,), (4 * hidden_size,)] * 2
    keys = jax.random.split(key, len(names))
    return {n: jax.random.uniform(kk, s, jnp.float32, minval=-k, maxval=k)
            for n, s, kk in zip(names, shapes, keys)}


# ---------------- pure-JAX reference (for correctness check) ----------------
def _lstm_dir_ref(x, w_ih, w_hh, b_ih, b_hh, reverse):
    B, T, D = x.shape
    H = w_hh.shape[1]

    def step(carry, xt):
        h, c = carry
        gates = xt @ w_ih.T + b_ih + h @ w_hh.T + b_hh
        i, f, g, o = jnp.split(gates, 4, axis=-1)
        c = jax.nn.sigmoid(f) * c + jax.nn.sigmoid(i) * jnp.tanh(g)
        h = jax.nn.sigmoid(o) * jnp.tanh(c)
        return (h, c), h

    xs = jnp.swapaxes(x, 0, 1)
    if reverse:
        xs = xs[::-1]
    _, hs = lax.scan(step, (jnp.zeros((B, H)), jnp.zeros((B, H))), xs)
    if reverse:
        hs = hs[::-1]
    return jnp.swapaxes(hs, 0, 1)


def bilstm_ref(x, p):
    fwd = _lstm_dir_ref(x, p['w_ih_f'], p['w_hh_f'], p['b_ih_f'], p['b_hh_f'], False)
    bwd = _lstm_dir_ref(x, p['w_ih_b'], p['w_hh_b'], p['b_ih_b'], p['b_hh_b'], True)
    return jnp.concatenate([fwd, bwd], axis=-1)


if __name__ == "__main__":
    B, T, D, H = 4, 8, 16, 32   # batch, seq (time_resolution), input_size, hidden_size
    key = jax.random.PRNGKey(0)
    kx, kp = jax.random.split(key)
    x = jax.random.normal(kx, (B, T, D), jnp.float32)
    params = init_bilstm_params(kp, D, H)

    out = bilstm_block_forward(x, params)
    out = jax.block_until_ready(out)

    assert out.shape == (B, T, 2 * H), out.shape
    ref = bilstm_ref(x, params)
    max_err = float(jnp.max(jnp.abs(out - ref)))
    if not jnp.allclose(out, ref, atol=1e-5, rtol=1e-5):
        raise AssertionError(f"Pallas BiLSTM mismatch vs reference, max_err={max_err}")
    print("KERNEL_OK")
</pallas_src>

<mosaic_0001>
module attributes {stable_mosaic.version = 11 : i64} {
  func.func @bilstm_kernel(%arg0: memref<64x16xf32, #tpu.memory_space<vmem>>, %arg1: memref<16x256xf32, #tpu.memory_space<vmem>>, %arg2: memref<64x256xf32, #tpu.memory_space<vmem>>, %arg3: memref<1x256xf32, #tpu.memory_space<vmem>>, %arg4: memref<8x8x64xf32, #tpu.memory_space<vmem>>, %arg5: memref<64x256xf32, #tpu.memory_space<vmem>>) attributes {dimension_semantics = [], scalar_prefetch = 0 : i64, scratch_operands = 1 : i64, tpu.core_type = #tpu.core_type<tc>} {
    %c0 = arith.constant 0 : index
    %c0_0 = arith.constant 0 : index
    %0 = vector.load %arg0[%c0, %c0_0] : memref<64x16xf32, #tpu.memory_space<vmem>>, vector<64x16xf32>
    %c0_1 = arith.constant 0 : index
    %c0_2 = arith.constant 0 : index
    %1 = vector.load %arg1[%c0_1, %c0_2] : memref<16x256xf32, #tpu.memory_space<vmem>>, vector<16x256xf32>
    %cst = arith.constant dense<0.000000e+00> : vector<64x256xf32>
    %2 = tpu.matmul %0, %1, %cst {dimension_numbers = #tpu.dot_dimension_numbers<[1], [0], [0], [1], [0, 0, 1, 1], [], []>} : vector<64x16xf32>, vector<16x256xf32>, vector<64x256xf32> -> vector<64x256xf32>
    %c0_3 = arith.constant 0 : index
    %c0_4 = arith.constant 0 : index
    %3 = vector.load %arg3[%c0_3, %c0_4] : memref<1x256xf32, #tpu.memory_space<vmem>>, vector<1x256xf32>
    %4 = vector.broadcast %3 : vector<1x256xf32> to vector<64x256xf32>
    %5 = arith.addf %2, %4 : vector<64x256xf32>
    %c0_5 = arith.constant 0 : index
    %c0_6 = arith.constant 0 : index
    %6 = vector.load %arg5[%c0_5, %c0_6] : memref<64x256xf32, #tpu.memory_space<vmem>>, vector<64x256xf32>
    tpu.vector_store %arg5[%c0_5, %c0_6], %5 {strides = array<i32>} : memref<64x256xf32, #tpu.memory_space<vmem>>, vector<64x256xf32>,
    %c0_7 = arith.constant 0 : index
    %c0_8 = arith.constant 0 : index
    %7 = vector.load %arg2[%c0_7, %c0_8] : memref<64x256xf32, #tpu.memory_space<vmem>>, vector<64x256xf32>
    %8 = tpu.iota {dimensions = array<i32: 1>} : vector<8x256xi32>
    %c64_i32 = arith.constant 64 : i32
    %c0_i32 = arith.constant 0 : i32
    %9 = arith.cmpi eq, %c64_i32, %c0_i32 : i32
    %c1_i32 = arith.constant 1 : i32
    %10 = arith.select %9, %c1_i32, %c64_i32 : i32
    %11 = vector.broadcast %10 : i32 to vector<8x256xi32>
    %12 = arith.remsi %8, %11 : vector<8x256xi32>
    %c0_i32_9 = arith.constant 0 : i32
    %13 = vector.broadcast %c0_i32_9 : i32 to vector<8x256xi32>
    %14 = arith.cmpi ne, %12, %13 : vector<8x256xi32>
    %c0_i32_10 = arith.constant 0 : i32
    %15 = vector.broadcast %c0_i32_10 : i32 to vector<8x256xi32>
    %16 = arith.cmpi slt, %12, %15 : vector<8x256xi32>
    %c0_i32_11 = arith.constant 0 : i32
    %17 = arith.cmpi slt, %10, %c0_i32_11 : i32
    %18 = vector.broadcast %17 : i1 to vector<8x256xi1>
    %19 = vector.broadcast %18 : vector<8x256xi1> to vector<8x256xi1>
    %20 = arith.xori %16, %19 : vector<8x256xi1>
    %21 = arith.andi %20, %14 : vector<8x256xi1>
    %22 = vector.broadcast %10 : i32 to vector<8x256xi32>
    %23 = arith.addi %12, %22 : vector<8x256xi32>
    %24 = arith.select %21, %23, %12 : vector<8x256xi1>, vector<8x256xi32>
    %c32_i32 = arith.constant 32 : i32
    %25 = vector.broadcast %c32_i32 : i32 to vector<8x256xi32>
    %26 = arith.cmpi slt, %24, %25 : vector<8x256xi32>
    %cst_12 = arith.constant 0.000000e+00 : f32
    %27 = vector.broadcast %cst_12 : f32 to vector<8x64xf32>
    %cst_13 = arith.constant 0.000000e+00 : f32
    %28 = vector.broadcast %cst_13 : f32 to vector<8x64xf32>
    %c0_i32_14 = arith.constant 0 : i32
    %c7_i32 = arith.constant 7 : i32
    %29 = arith.subi %c7_i32, %c0_i32_14 : i32
    %c8_i32 = arith.constant 8 : i32
    %30 = arith.muli %c0_i32_14, %c8_i32 : i32
    %31 = tpu.assume_multiple %30, 8 : i32
    %32 = arith.index_cast %31 : i32 to index
    %c0_15 = arith.constant 0 : index
    %33 = vector.load %arg5[%32, %c0_15] : memref<64x256xf32, #tpu.memory_space<vmem>>, vector<8x256xf32>
    %c8_i32_16 = arith.constant 8 : i32
    %34 = arith.muli %29, %c8_i32_16 : i32
    %35 = tpu.assume_multiple %34, 8 : i32
    %36 = arith.index_cast %35 : i32 to index
    %c0_17 = arith.constant 0 : index
    %37 = vector.load %arg5[%36, %c0_17] : memref<64x256xf32, #tpu.memory_space<vmem>>, vector<8x256xf32>
    %38 = arith.select %26, %33, %37 : vector<8x256xi1>, vector<8x256xf32>
    %cst_18 = arith.constant dense<0.000000e+00> : vector<8x256xf32>
    %39 = tpu.matmul %27, %7, %cst_18 {dimension_numbers = #tpu.dot_dimension_numbers<[1], [0], [0], [1], [0, 0, 1, 1], [], []>} : vector<8x64xf32>, vector<64x256xf32>, vector<8x256xf32> -> vector<8x256xf32>
    %40 = arith.addf %38, %39 : vector<8x256xf32>
    %41 = vector.extract_strided_slice %40 {offsets = [0, 0], sizes = [8, 64], strides = [1, 1]} : vector<8x256xf32> to vector<8x64xf32>
    %42 = arith.negf %41 : vector<8x64xf32>
    %43 = math.exp %42 : vector<8x64xf32>
    %cst_19 = arith.constant 1.000000e+00 : f32
    %44 = vector.broadcast %cst_19 : f32 to vector<8x64xf32>
    %45 = arith.addf %44, %43 : vector<8x64xf32>
    %46 = arith.divf %44, %45 : vector<8x64xf32>
    %47 = vector.extract_strided_slice %40 {offsets = [0, 64], sizes = [8, 64], strides = [1, 1]} : vector<8x256xf32> to vector<8x64xf32>
    %48 = arith.negf %47 : vector<8x64xf32>
    %49 = math.exp %48 : vector<8x64xf32>
    %cst_20 = arith.constant 1.000000e+00 : f32
    %50 = vector.broadcast %cst_20 : f32 to vector<8x64xf32>
    %51 = arith.addf %50, %49 : vector<8x64xf32>
    %52 = arith.divf %50, %51 : vector<8x64xf32>
    %53 = vector.extract_strided_slice %40 {offsets = [0, 128], sizes = [8, 64], strides = [1, 1]} : vector<8x256xf32> to vector<8x64xf32>
    %54 = math.tanh %53 : vector<8x64xf32>
    %55 = vector.extract_strided_slice %40 {offsets = [0, 192], sizes = [8, 64], strides = [1, 1]} : vector<8x256xf32> to vector<8x64xf32>
    %56 = arith.negf %55 : vector<8x64xf32>
    %57 = math.exp %56 : vector<8x64xf32>
    %cst_21 = arith.constant 1.000000e+00 : f32
    %58 = vector.broadcast %cst_21 : f32 to vector<8x64xf32>
    %59 = arith.addf %58, %57 : vector<8x64xf32>
    %60 = arith.divf %58, %59 : vector<8x64xf32>
    %61 = arith.mulf %52, %28 : vector<8x64xf32>
    %62 = arith.mulf %46, %54 : vector<8x64xf32>
    %63 = arith.addf %61, %62 : vector<8x64xf32>
    %64 = math.tanh %63 : vector<8x64xf32>
    %65 = arith.mulf %60, %64 : vector<8x64xf32>
    %66 = vector.extract_strided_slice %65 {offsets = [0, 0], sizes = [8, 32], strides = [1, 1]} : vector<8x64xf32> to vector<8x32xf32>
    %67 = vector.shape_cast %66 : vector<8x32xf32> to vector<1x8x32xf32>
    %68 = arith.index_cast %c0_i32_14 : i32 to index
    %c0_22 = arith.constant 0 : index
    %c0_23 = arith.constant 0 : index
    %69 = vector.load %arg4[%68, %c0_22, %c0_23] : memref<8x8x64xf32, #tpu.memory_space<vmem>>, vector<1x8x32xf32>
    tpu.vector_store %arg4[%68, %c0_22, %c0_23], %67 {strides = array<i32>} : memref<8x8x64xf32, #tpu.memory_space<vmem>>, vector<1x8x32xf32>,
    %70 = vector.extract_strided_slice %65 {offsets = [0, 32], sizes = [8, 32], strides = [1, 1]} : vector<8x64xf32> to vector<8x32xf32>
    %71 = vector.shape_cast %70 : vector<8x32xf32> to vector<1x8x32xf32>
    %72 = arith.index_cast %29 : i32 to index
    %c0_24 = arith.constant 0 : index
    %c32 = arith.constant 32 : index
    %73 = vector.load %arg4[%72, %c0_24, %c32] : memref<8x8x64xf32, #tpu.memory_space<vmem>>, vector<1x8x32xf32>
    tpu.vector_store %arg4[%72, %c0_24, %c32], %71 {strides = array<i32>} : memref<8x8x64xf32, #tpu.memory_space<vmem>>, vector<1x8x32xf32>,
    %c1_i32_25 = arith.constant 1 : i32
    %c7_i32_26 = arith.constant 7 : i32
    %74 = arith.subi %c7_i32_26, %c1_i32_25 : i32
    %c8_i32_27 = arith.constant 8 : i32
    %75 = arith.muli %c1_i32_25, %c8_i32_27 : i32
    %76 = tpu.assume_multiple %75, 8 : i32
    %77 = arith.index_cast %76 : i32 to index
    %c0_28 = arith.constant 0 : index
    %78 = vector.load %arg5[%77, %c0_28] : memref<64x256xf32, #tpu.memory_space<vmem>>, vector<8x256xf32>
    %c8_i32_29 = arith.constant 8 : i32
    %79 = arith.muli %74, %c8_i32_29 : i32
    %80 = tpu.assume_multiple %79, 8 : i32
    %81 = arith.index_cast %80 : i32 to index
    %c0_30 = arith.constant 0 : index
    %82 = vector.load %arg5[%81, %c0_30] : memref<64x256xf32, #tpu.memory_space<vmem>>, vector<8x256xf32>
    %83 = arith.select %26, %78, %82 : vector<8x256xi1>, vector<8x256xf32>
    %cst_31 = arith.constant dense<0.000000e+00> : vector<8x256xf32>
    %84 = tpu.matmul %65, %7, %cst_31 {dimension_numbers = #tpu.dot_dimension_numbers<[1], [0], [0], [1], [0, 0, 1, 1], [], []>} : vector<8x64xf32>, vector<64x256xf32>, vector<8x256xf32> -> vector<8x256xf32>
    %85 = arith.addf %83, %84 : vector<8x256xf32>
    %86 = vector.extract_strided_slice %85 {offsets = [0, 0], sizes = [8, 64], strides = [1, 1]} : vector<8x256xf32> to vector<8x64xf32>
    %87 = arith.negf %86 : vector<8x64xf32>
    %88 = math.exp %87 : vector<8x64xf32>
    %cst_32 = arith.constant 1.000000e+00 : f32
    %89 = vector.broadcast %cst_32 : f32 to vector<8x64xf32>
    %90 = arith.addf %89, %88 : vector<8x64xf32>
    %91 = arith.divf %89, %90 : vector<8x64xf32>
    %92 = vector.extract_strided_slice %85 {offsets = [0, 64], sizes = [8, 64], strides = [1, 1]} : vector<8x256xf32> to vector<8x64xf32>
    %93 = arith.negf %92 : vector<8x64xf32>
    %94 = math.exp %93 : vector<8x64xf32>
    %cst_33 = arith.constant 1.000000e+00 : f32
    %95 = vector.broadcast %cst_33 : f32 to vector<8x64xf32>
    %96 = arith.addf %95, %94 : vector<8x64xf32>
    %97 = arith.divf %95, %96 : vector<8x64xf32>
    %98 = vector.extract_strided_slice %85 {offsets = [0, 128], sizes = [8, 64], strides = [1, 1]} : vector<8x256xf32> to vector<8x64xf32>
    %99 = math.tanh %98 : vector<8x64xf32>
    %100 = vector.extract_strided_slice %85 {offsets = [0, 192], sizes = [8, 64], strides = [1, 1]} : vector<8x256xf32> to vector<8x64xf32>
    %101 = arith.negf %100 : vector<8x64xf32>
    %102 = math.exp %101 : vector<8x64xf32>
    %cst_34 = arith.constant 1.000000e+00 : f32
    %103 = vector.broadcast %cst_34 : f32 to vector<8x64xf32>
    %104 = arith.addf %103, %102 : vector<8x64xf32>
    %105 = arith.divf %103, %104 : vector<8x64xf32>
    %106 = arith.mulf %97, %63 : vector<8x64xf32>
    %107 = arith.mulf %91, %99 : vector<8x64xf32>
    %108 = arith.addf %106, %107 : vector<8x64xf32>
    %109 = math.tanh %108 : vector<8x64xf32>
    %110 = arith.mulf %105, %109 : vector<8x64xf32>
    %111 = vector.extract_strided_slice %110 {offsets = [0, 0], sizes = [8, 32], strides = [1, 1]} : vector<8x64xf32> to vector<8x32xf32>
    %112 = vector.shape_cast %111 : vector<8x32xf32> to vector<1x8x32xf32>
    %113 = arith.index_cast %c1_i32_25 : i32 to index
    %c0_35 = arith.constant 0 : index
    %c0_36 = arith.constant 0 : index
    %114 = vector.load %arg4[%113, %c0_35, %c0_36] : memref<8x8x64xf32, #tpu.memory_space<vmem>>, vector<1x8x32xf32>
    tpu.vector_store %arg4[%113, %c0_35, %c0_36], %112 {strides = array<i32>} : memref<8x8x64xf32, #tpu.memory_space<vmem>>, vector<1x8x32xf32>,
    %115 = vector.extract_strided_slice %110 {offsets = [0, 32], sizes = [8, 32], strides = [1, 1]} : vector<8x64xf32> to vector<8x32xf32>
    %116 = vector.shape_cast %115 : vector<8x32xf32> to vector<1x8x32xf32>
    %117 = arith.index_cast %74 : i32 to index
    %c0_37 = arith.constant 0 : index
    %c32_38 = arith.constant 32 : index
    %118 = vector.load %arg4[%117, %c0_37, %c32_38] : memref<8x8x64xf32, #tpu.memory_space<vmem>>, vector<1x8x32xf32>
    tpu.vector_store %arg4[%117, %c0_37, %c32_38], %116 {strides = array<i32>} : memref<8x8x64xf32, #tpu.memory_space<vmem>>, vector<1x8x32xf32>,
    %c2_i32 = arith.constant 2 : i32
    %c7_i32_39 = arith.constant 7 : i32
    %119 = arith.subi %c7_i32_39, %c2_i32 : i32
    %c8_i32_40 = arith.constant 8 : i32
    %120 = arith.muli %c2_i32, %c8_i32_40 : i32
    %121 = tpu.assume_multiple %120, 8 : i32
    %122 = arith.index_cast %121 : i32 to index
    %c0_41 = arith.constant 0 : index
    %123 = vector.load %arg5[%122, %c0_41] : memref<64x256xf32, #tpu.memory_space<vmem>>, vector<8x256xf32>
    %c8_i32_42 = arith.constant 8 : i32
    %124 = arith.muli %119, %c8_i32_42 : i32
    %125 = tpu.assume_multiple %124, 8 : i32
    %126 = arith.index_cast %125 : i32 to index
    %c0_43 = arith.constant 0 : index
    %127 = vector.load %arg5[%126, %c0_43] : memref<64x256xf32, #tpu.memory_space<vmem>>, vector<8x256xf32>
    %128 = arith.select %26, %123, %127 : vector<8x256xi1>, vector<8x256xf32>
    %cst_44 = arith.constant dense<0.000000e+00> : vector<8x256xf32>
    %129 = tpu.matmul %110, %7, %cst_44 {dimension_numbers = #tpu.dot_dimension_numbers<[1], [0], [0], [1], [0, 0, 1, 1], [], []>} : vector<8x64xf32>, vector<64x256xf32>, vector<8x256xf32> -> vector<8x256xf32>
    %130 = arith.addf %128, %129 : vector<8x256xf32>
    %131 = vector.extract_strided_slice %130 {offsets = [0, 0], sizes = [8, 64], strides = [1, 1]} : vector<8x256xf32> to vector<8x64xf32>
    %132 = arith.negf %131 : vector<8x64xf32>
    %133 = math.exp %132 : vector<8x64xf32>
    %cst_45 = arith.constant 1.000000e+00 : f32
    %134 = vector.broadcast %cst_45 : f32 to vector<8x64xf32>
    %135 = arith.addf %134, %133 : vector<8x64xf32>
    %136 = arith.divf %134, %135 : vector<8x64xf32>
    %137 = vector.extract_strided_slice %130 {offsets = [0, 64], sizes = [8, 64], strides = [1, 1]} : vector<8x256xf32> to vector<8x64xf32>
    %138 = arith.negf %137 : vector<8x64xf32>
    %139 = math.exp %138 : vector<8x64xf32>
    %cst_46 = arith.constant 1.000000e+00 : f32
    %140 = vector.broadcast %cst_46 : f32 to vector<8x64xf32>
    %141 = arith.addf %140, %139 : vector<8x64xf32>
    %142 = arith.divf %140, %141 : vector<8x64xf32>
    %143 = vector.extract_strided_slice %130 {offsets = [0, 128], sizes = [8, 64], strides = [1, 1]} : vector<8x256xf32> to vector<8x64xf32>
    %144 = math.tanh %143 : vector<8x64xf32>
    %145 = vector.extract_strided_slice %130 {offsets = [0, 192], sizes = [8, 64], strides = [1, 1]} : vector<8x256xf32> to vector<8x64xf32>
    %146 = arith.negf %145 : vector<8x64xf32>
    %147 = math.exp %146 : vector<8x64xf32>
    %cst_47 = arith.constant 1.000000e+00 : f32
    %148 = vector.broadcast %cst_47 : f32 to vector<8x64xf32>
    %149 = arith.addf %148, %147 : vector<8x64xf32>
    %150 = arith.divf %148, %149 : vector<8x64xf32>
    %151 = arith.mulf %142, %108 : vector<8x64xf32>
    %152 = arith.mulf %136, %144 : vector<8x64xf32>
    %153 = arith.addf %151, %152 : vector<8x64xf32>
    %154 = math.tanh %153 : vector<8x64xf32>
    %155 = arith.mulf %150, %154 : vector<8x64xf32>
    %156 = vector.extract_strided_slice %155 {offsets = [0, 0], sizes = [8, 32], strides = [1, 1]} : vector<8x64xf32> to vector<8x32xf32>
    %157 = vector.shape_cast %156 : vector<8x32xf32> to vector<1x8x32xf32>
    %158 = arith.index_cast %c2_i32 : i32 to index
    %c0_48 = arith.constant 0 : index
    %c0_49 = arith.constant 0 : index
    %159 = vector.load %arg4[%158, %c0_48, %c0_49] : memref<8x8x64xf32, #tpu.memory_space<vmem>>, vector<1x8x32xf32>
    tpu.vector_store %arg4[%158, %c0_48, %c0_49], %157 {strides = array<i32>} : memref<8x8x64xf32, #tpu.memory_space<vmem>>, vector<1x8x32xf32>,
    %160 = vector.extract_strided_slice %155 {offsets = [0, 32], sizes = [8, 32], strides = [1, 1]} : vector<8x64xf32> to vector<8x32xf32>
    %161 = vector.shape_cast %160 : vector<8x32xf32> to vector<1x8x32xf32>
    %162 = arith.index_cast %119 : i32 to index
    %c0_50 = arith.constant 0 : index
    %c32_51 = arith.constant 32 : index
    %163 = vector.load %arg4[%162, %c0_50, %c32_51] : memref<8x8x64xf32, #tpu.memory_space<vmem>>, vector<1x8x32xf32>
    tpu.vector_store %arg4[%162, %c0_50, %c32_51], %161 {strides = array<i32>} : memref<8x8x64xf32, #tpu.memory_space<vmem>>, vector<1x8x32xf32>,
    %c3_i32 = arith.constant 3 : i32
    %c7_i32_52 = arith.constant 7 : i32
    %164 = arith.subi %c7_i32_52, %c3_i32 : i32
    %c8_i32_53 = arith.constant 8 : i32
    %165 = arith.muli %c3_i32, %c8_i32_53 : i32
    %166 = tpu.assume_multiple %165, 8 : i32
    %167 = arith.index_cast %166 : i32 to index
    %c0_54 = arith.constant 0 : index
    %168 = vector.load %arg5[%167, %c0_54] : memref<64x256xf32, #tpu.memory_space<vmem>>, vector<8x256xf32>
    %c8_i32_55 = arith.constant 8 : i32
    %169 = arith.muli %164, %c8_i32_55 : i32
    %170 = tpu.assume_multiple %169, 8 : i32
    %171 = arith.index_cast %170 : i32 to index
    %c0_56 = arith.constant 0 : index
    %172 = vector.load %arg5[%171, %c0_56] : memref<64x256xf32, #tpu.memory_space<vmem>>, vector<8x256xf32>
    %173 = arith.select %26, %168, %172 : vector<8x256xi1>, vector<8x256xf32>
    %cst_57 = arith.constant dense<0.000000e+00> : vector<8x256xf32>
    %174 = tpu.matmul %155, %7, %cst_57 {dimension_numbers = #tpu.dot_dimension_numbers<[1], [0], [0], [1], [0, 0, 1, 1], [], []>} : vector<8x64xf32>, vector<64x256xf32>, vector<8x256xf32> -> vector<8x256xf32>
    %175 = arith.addf %173, %174 : vector<8x256xf32>
    %176 = vector.extract_strided_slice %175 {offsets = [0, 0], sizes = [8, 64], strides = [1, 1]} : vector<8x256xf32> to vector<8x64xf32>
    %177 = arith.negf %176 : vector<8x64xf32>
    %178 = math.exp %177 : vector<8x64xf32>
    %cst_58 = arith.constant 1.000000e+00 : f32
    %179 = vector.broadcast %cst_58 : f32 to vector<8x64xf32>
    %180 = arith.addf %179, %178 : vector<8x64xf32>
    %181 = arith.divf %179, %180 : vector<8x64xf32>
    %182 = vector.extract_strided_slice %175 {offsets = [0, 64], sizes = [8, 64], strides = [1, 1]} : vector<8x256xf32> to vector<8x64xf32>
    %183 = arith.negf %182 : vector<8x64xf32>
    %184 = math.exp %183 : vector<8x64xf32>
    %cst_59 = arith.constant 1.000000e+00 : f32
    %185 = vector.broadcast %cst_59 : f32 to vector<8x64xf32>
    %186 = arith.addf %185, %184 : vector<8x64xf32>
    %187 = arith.divf %185, %186 : vector<8x64xf32>
    %188 = vector.extract_strided_slice %175 {offsets = [0, 128], sizes = [8, 64], strides = [1, 1]} : vector<8x256xf32> to vector<8x64xf32>
    %189 = math.tanh %188 : vector<8x64xf32>
    %190 = vector.extract_strided_slice %175 {offsets = [0, 192], sizes = [8, 64], strides = [1, 1]} : vector<8x256xf32> to vector<8x64xf32>
    %191 = arith.negf %190 : vector<8x64xf32>
    %192 = math.exp %191 : vector<8x64xf32>
    %cst_60 = arith.constant 1.000000e+00 : f32
    %193 = vector.broadcast %cst_60 : f32 to vector<8x64xf32>
    %194 = arith.addf %193, %192 : vector<8x64xf32>
    %195 = arith.divf %193, %194 : vector<8x64xf32>
    %196 = arith.mulf %187, %153 : vector<8x64xf32>
    %197 = arith.mulf %181, %189 : vector<8x64xf32>
    %198 = arith.addf %196, %197 : vector<8x64xf32>
    %199 = math.tanh %198 : vector<8x64xf32>
    %200 = arith.mulf %195, %199 : vector<8x64xf32>
    %201 = vector.extract_strided_slice %200 {offsets = [0, 0], sizes = [8, 32], strides = [1, 1]} : vector<8x64xf32> to vector<8x32xf32>
    %202 = vector.shape_cast %201 : vector<8x32xf32> to vector<1x8x32xf32>
    %203 = arith.index_cast %c3_i32 : i32 to index
    %c0_61 = arith.constant 0 : index
    %c0_62 = arith.constant 0 : index
    %204 = vector.load %arg4[%203, %c0_61, %c0_62] : memref<8x8x64xf32, #tpu.memory_space<vmem>>, vector<1x8x32xf32>
    tpu.vector_store %arg4[%203, %c0_61, %c0_62], %202 {strides = array<i32>} : memref<8x8x64xf32, #tpu.memory_space<vmem>>, vector<1x8x32xf32>,
    %205 = vector.extract_strided_slice %200 {offsets = [0, 32], sizes = [8, 32], strides = [1, 1]} : vector<8x64xf32> to vector<8x32xf32>
    %206 = vector.shape_cast %205 : vector<8x32xf32> to vector<1x8x32xf32>
    %207 = arith.index_cast %164 : i32 to index
    %c0_63 = arith.constant 0 : index
    %c32_64 = arith.constant 32 : index
    %208 = vector.load %arg4[%207, %c0_63, %c32_64] : memref<8x8x64xf32, #tpu.memory_space<vmem>>, vector<1x8x32xf32>
    tpu.vector_store %arg4[%207, %c0_63, %c32_64], %206 {strides = array<i32>} : memref<8x8x64xf32, #tpu.memory_space<vmem>>, vector<1x8x32xf32>,
    %c4_i32 = arith.constant 4 : i32
    %c7_i32_65 = arith.constant 7 : i32
    %209 = arith.subi %c7_i32_65, %c4_i32 : i32
    %c8_i32_66 = arith.constant 8 : i32
    %210 = arith.muli %c4_i32, %c8_i32_66 : i32
    %211 = tpu.assume_multiple %210, 8 : i32
    %212 = arith.index_cast %211 : i32 to index
    %c0_67 = arith.constant 0 : index
    %213 = vector.load %arg5[%212, %c0_67] : memref<64x256xf32, #tpu.memory_space<vmem>>, vector<8x256xf32>
    %c8_i32_68 = arith.constant 8 : i32
    %214 = arith.muli %209, %c8_i32_68 : i32
    %215 = tpu.assume_multiple %214, 8 : i32
    %216 = arith.index_cast %215 : i32 to index
    %c0_69 = arith.constant 0 : index
    %217 = vector.load %arg5[%216, %c0_69] : memref<64x256xf32, #tpu.memory_space<vmem>>, vector<8x256xf32>
    %218 = arith.select %26, %213, %217 : vector<8x256xi1>, vector<8x256xf32>
    %cst_70 = arith.constant dense<0.000000e+00> : vector<8x256xf32>
    %219 = tpu.matmul %200, %7, %cst_70 {dimension_numbers = #tpu.dot_dimension_numbers<[1], [0], [0], [1], [0, 0, 1, 1], [], []>} : vector<8x64xf32>, vector<64x256xf32>, vector<8x256xf32> -> vector<8x256xf32>
    %220 = arith.addf %218, %219 : vector<8x256xf32>
    %221 = vector.extract_strided_slice %220 {offsets = [0, 0], sizes = [8, 64], strides = [1, 1]} : vector<8x256xf32> to vector<8x64xf32>
    %222 = arith.negf %221 : vector<8x64xf32>
    %223 = math.exp %222 : vector<8x64xf32>
    %cst_71 = arith.constant 1.000000e+00 : f32
    %224 = vector.broadcast %cst_71 : f32 to vector<8x64xf32>
    %225 = arith.addf %224, %223 : vector<8x64xf32>
    %226 = arith.divf %224, %225 : vector<8x64xf32>
    %227 = vector.extract_strided_slice %220 {offsets = [0, 64], sizes = [8, 64], strides = [1, 1]} : vector<8x256xf32> to vector<8x64xf32>
    %228 = arith.negf %227 : vector<8x64xf32>
    %229 = math.exp %228 : vector<8x64xf32>
    %cst_72 = arith.constant 1.000000e+00 : f32
    %230 = vector.broadcast %cst_72 : f32 to vector<8x64xf32>
    %231 = arith.addf %230, %229 : vector<8x64xf32>
    %232 = arith.divf %230, %231 : vector<8x64xf32>
    %233 = vector.extract_strided_slice %220 {offsets = [0, 128], sizes = [8, 64], strides = [1, 1]} : vector<8x256xf32> to vector<8x64xf32>
    %234 = math.tanh %233 : vector<8x64xf32>
    %235 = vector.extract_strided_slice %220 {offsets = [0, 192], sizes = [8, 64], strides = [1, 1]} : vector<8x256xf32> to vector<8x64xf32>
    %236 = arith.negf %235 : vector<8x64xf32>
    %237 = math.exp %236 : vector<8x64xf32>
    %cst_73 = arith.constant 1.000000e+00 : f32
    %238 = vector.broadcast %cst_73 : f32 to vector<8x64xf32>
    %239 = arith.addf %238, %237 : vector<8x64xf32>
    %240 = arith.divf %238, %239 : vector<8x64xf32>
    %241 = arith.mulf %232, %198 : vector<8x64xf32>
    %242 = arith.mulf %226, %234 : vector<8x64xf32>
    %243 = arith.addf %241, %242 : vector<8x64xf32>
    %244 = math.tanh %243 : vector<8x64xf32>
    %245 = arith.mulf %240, %244 : vector<8x64xf32>
    %246 = vector.extract_strided_slice %245 {offsets = [0, 0], sizes = [8, 32], strides = [1, 1]} : vector<8x64xf32> to vector<8x32xf32>
    %247 = vector.shape_cast %246 : vector<8x32xf32> to vector<1x8x32xf32>
    %248 = arith.index_cast %c4_i32 : i32 to index
    %c0_74 = arith.constant 0 : index
    %c0_75 = arith.constant 0 : index
    %249 = vector.load %arg4[%248, %c0_74, %c0_75] : memref<8x8x64xf32, #tpu.memory_space<vmem>>, vector<1x8x32xf32>
    tpu.vector_store %arg4[%248, %c0_74, %c0_75], %247 {strides = array<i32>} : memref<8x8x64xf32, #tpu.memory_space<vmem>>, vector<1x8x32xf32>,
    %250 = vector.extract_strided_slice %245 {offsets = [0, 32], sizes = [8, 32], strides = [1, 1]} : vector<8x64xf32> to vector<8x32xf32>
    %251 = vector.shape_cast %250 : vector<8x32xf32> to vector<1x8x32xf32>
    %252 = arith.index_cast %209 : i32 to index
    %c0_76 = arith.constant 0 : index
    %c32_77 = arith.constant 32 : index
    %253 = vector.load %arg4[%252, %c0_76, %c32_77] : memref<8x8x64xf32, #tpu.memory_space<vmem>>, vector<1x8x32xf32>
    tpu.vector_store %arg4[%252, %c0_76, %c32_77], %251 {strides = array<i32>} : memref<8x8x64xf32, #tpu.memory_space<vmem>>, vector<1x8x32xf32>,
    %c5_i32 = arith.constant 5 : i32
    %c7_i32_78 = arith.constant 7 : i32
    %254 = arith.subi %c7_i32_78, %c5_i32 : i32
    %c8_i32_79 = arith.constant 8 : i32
    %255 = arith.muli %c5_i32, %c8_i32_79 : i32
    %256 = tpu.assume_multiple %255, 8 : i32
    %257 = arith.index_cast %256 : i32 to index
    %c0_80 = arith.constant 0 : index
    %258 = vector.load %arg5[%257, %c0_80] : memref<64x256xf32, #tpu.memory_space<vmem>>, vector<8x256xf32>
    %c8_i32_81 = arith.constant 8 : i32
    %259 = arith.muli %254, %c8_i32_81 : i32
    %260 = tpu.assume_multiple %259, 8 : i32
    %261 = arith.index_cast %260 : i32 to index
    %c0_82 = arith.constant 0 : index
    %262 = vector.load %arg5[%261, %c0_82] : memref<64x256xf32, #tpu.memory_space<vmem>>, vector<8x256xf32>
    %263 = arith.select %26, %258, %262 : vector<8x256xi1>, vector<8x256xf32>
    %cst_83 = arith.constant dense<0.000000e+00> : vector<8x256xf32>
    %264 = tpu.matmul %245, %7, %cst_83 {dimension_numbers = #tpu.dot_dimension_numbers<[1], [0], [0], [1], [0, 0, 1, 1], [], []>} : vector<8x64xf32>, vector<64x256xf32>, vector<8x256xf32> -> vector<8x256xf32>
    %265 = arith.addf %263, %264 : vector<8x256xf32>
    %266 = vector.extract_strided_slice %265 {offsets = [0, 0], sizes = [8, 64], strides = [1, 1]} : vector<8x256xf32> to vector<8x64xf32>
    %267 = arith.negf %266 : vector<8x64xf32>
    %268 = math.exp %267 : vector<8x64xf32>
    %cst_84 = arith.constant 1.000000e+00 : f32
    %269 = vector.broadcast %cst_84 : f32 to vector<8x64xf32>
    %270 = arith.addf %269, %268 : vector<8x64xf32>
    %271 = arith.divf %269, %270 : vector<8x64xf32>
    %272 = vector.extract_strided_slice %265 {offsets = [0, 64], sizes = [8, 64], strides = [1, 1]} : vector<8x256xf32> to vector<8x64xf32>
    %273 = arith.negf %272 : vector<8x64xf32>
    %274 = math.exp %273 : vector<8x64xf32>
    %cst_85 = arith.constant 1.000000e+00 : f32
    %275 = vector.broadcast %cst_85 : f32 to vector<8x64xf32>
    %276 = arith.addf %275, %274 : vector<8x64xf32>
    %277 = arith.divf %275, %276 : vector<8x64xf32>
    %278 = vector.extract_strided_slice %265 {offsets = [0, 128], sizes = [8, 64], strides = [1, 1]} : vector<8x256xf32> to vector<8x64xf32>
    %279 = math.tanh %278 : vector<8x64xf32>
    %280 = vector.extract_strided_slice %265 {offsets = [0, 192], sizes = [8, 64], strides = [1, 1]} : vector<8x256xf32> to vector<8x64xf32>
    %281 = arith.negf %280 : vector<8x64xf32>
    %282 = math.exp %281 : vector<8x64xf32>
    %cst_86 = arith.constant 1.000000e+00 : f32
    %283 = vector.broadcast %cst_86 : f32 to vector<8x64xf32>
    %284 = arith.addf %283, %282 : vector<8x64xf32>
    %285 = arith.divf %283, %284 : vector<8x64xf32>
    %286 = arith.mulf %277, %243 : vector<8x64xf32>
    %287 = arith.mulf %271, %279 : vector<8x64xf32>
    %288 = arith.addf %286, %287 : vector<8x64xf32>
    %289 = math.tanh %288 : vector<8x64xf32>
    %290 = arith.mulf %285, %289 : vector<8x64xf32>
    %291 = vector.extract_strided_slice %290 {offsets = [0, 0], sizes = [8, 32], strides = [1, 1]} : vector<8x64xf32> to vector<8x32xf32>
    %292 = vector.shape_cast %291 : vector<8x32xf32> to vector<1x8x32xf32>
    %293 = arith.index_cast %c5_i32 : i32 to index
    %c0_87 = arith.constant 0 : index
    %c0_88 = arith.constant 0 : index
    %294 = vector.load %arg4[%293, %c0_87, %c0_88] : memref<8x8x64xf32, #tpu.memory_space<vmem>>, vector<1x8x32xf32>
    tpu.vector_store %arg4[%293, %c0_87, %c0_88], %292 {strides = array<i32>} : memref<8x8x64xf32, #tpu.memory_space<vmem>>, vector<1x8x32xf32>,
    %295 = vector.extract_strided_slice %290 {offsets = [0, 32], sizes = [8, 32], strides = [1, 1]} : vector<8x64xf32> to vector<8x32xf32>
    %296 = vector.shape_cast %295 : vector<8x32xf32> to vector<1x8x32xf32>
    %297 = arith.index_cast %254 : i32 to index
    %c0_89 = arith.constant 0 : index
    %c32_90 = arith.constant 32 : index
    %298 = vector.load %arg4[%297, %c0_89, %c32_90] : memref<8x8x64xf32, #tpu.memory_space<vmem>>, vector<1x8x32xf32>
    tpu.vector_store %arg4[%297, %c0_89, %c32_90], %296 {strides = array<i32>} : memref<8x8x64xf32, #tpu.memory_space<vmem>>, vector<1x8x32xf32>,
    %c6_i32 = arith.constant 6 : i32
    %c7_i32_91 = arith.constant 7 : i32
    %299 = arith.subi %c7_i32_91, %c6_i32 : i32
    %c8_i32_92 = arith.constant 8 : i32
    %300 = arith.muli %c6_i32, %c8_i32_92 : i32
    %301 = tpu.assume_multiple %300, 8 : i32
    %302 = arith.index_cast %301 : i32 to index
    %c0_93 = arith.constant 0 : index
    %303 = vector.load %arg5[%302, %c0_93] : memref<64x256xf32, #tpu.memory_space<vmem>>, vector<8x256xf32>
    %c8_i32_94 = arith.constant 8 : i32
    %304 = arith.muli %299, %c8_i32_94 : i32
    %305 = tpu.assume_multiple %304, 8 : i32
    %306 = arith.index_cast %305 : i32 to index
    %c0_95 = arith.constant 0 : index
    %307 = vector.load %arg5[%306, %c0_95] : memref<64x256xf32, #tpu.memory_space<vmem>>, vector<8x256xf32>
    %308 = arith.select %26, %303, %307 : vector<8x256xi1>, vector<8x256xf32>
    %cst_96 = arith.constant dense<0.000000e+00> : vector<8x256xf32>
    %309 = tpu.matmul %290, %7, %cst_96 {dimension_numbers = #tpu.dot_dimension_numbers<[1], [0], [0], [1], [0, 0, 1, 1], [], []>} : vector<8x64xf32>, vector<64x256xf32>, vector<8x256xf32> -> vector<8x256xf32>
    %310 = arith.addf %308, %309 : vector<8x256xf32>
    %311 = vector.extract_strided_slice %310 {offsets = [0, 0], sizes = [8, 64], strides = [1, 1]} : vector<8x256xf32> to vector<8x64xf32>
    %312 = arith.negf %311 : vector<8x64xf32>
    %313 = math.exp %312 : vector<8x64xf32>
    %cst_97 = arith.constant 1.000000e+00 : f32
    %314 = vector.broadcast %cst_97 : f32 to vector<8x64xf32>
    %315 = arith.addf %314, %313 : vector<8x64xf32>
    %316 = arith.divf %314, %315 : vector<8x64xf32>
    %317 = vector.extract_strided_slice %310 {offsets = [0, 64], sizes = [8, 64], strides = [1, 1]} : vector<8x256xf32> to vector<8x64xf32>
    %318 = arith.negf %317 : vector<8x64xf32>
    %319 = math.exp %318 : vector<8x64xf32>
    %cst_98 = arith.constant 1.000000e+00 : f32
    %320 = vector.broadcast %cst_98 : f32 to vector<8x64xf32>
    %321 = arith.addf %320, %319 : vector<8x64xf32>
    %322 = arith.divf %320, %321 : vector<8x64xf32>
    %323 = vector.extract_strided_slice %310 {offsets = [0, 128], sizes = [8, 64], strides = [1, 1]} : vector<8x256xf32> to vector<8x64xf32>
    %324 = math.tanh %323 : vector<8x64xf32>
    %325 = vector.extract_strided_slice %310 {offsets = [0, 192], sizes = [8, 64], strides = [1, 1]} : vector<8x256xf32> to vector<8x64xf32>
    %326 = arith.negf %325 : vector<8x64xf32>
    %327 = math.exp %326 : vector<8x64xf32>
    %cst_99 = arith.constant 1.000000e+00 : f32
    %328 = vector.broadcast %cst_99 : f32 to vector<8x64xf32>
    %329 = arith.addf %328, %327 : vector<8x64xf32>
    %330 = arith.divf %328, %329 : vector<8x64xf32>
    %331 = arith.mulf %322, %288 : vector<8x64xf32>
    %332 = arith.mulf %316, %324 : vector<8x64xf32>
    %333 = arith.addf %331, %332 : vector<8x64xf32>
    %334 = math.tanh %333 : vector<8x64xf32>
    %335 = arith.mulf %330, %334 : vector<8x64xf32>
    %336 = vector.extract_strided_slice %335 {offsets = [0, 0], sizes = [8, 32], strides = [1, 1]} : vector<8x64xf32> to vector<8x32xf32>
    %337 = vector.shape_cast %336 : vector<8x32xf32> to vector<1x8x32xf32>
    %338 = arith.index_cast %c6_i32 : i32 to index
    %c0_100 = arith.constant 0 : index
    %c0_101 = arith.constant 0 : index
    %339 = vector.load %arg4[%338, %c0_100, %c0_101] : memref<8x8x64xf32, #tpu.memory_space<vmem>>, vector<1x8x32xf32>
    tpu.vector_store %arg4[%338, %c0_100, %c0_101], %337 {strides = array<i32>} : memref<8x8x64xf32, #tpu.memory_space<vmem>>, vector<1x8x32xf32>,
    %340 = vector.extract_strided_slice %335 {offsets = [0, 32], sizes = [8, 32], strides = [1, 1]} : vector<8x64xf32> to vector<8x32xf32>
    %341 = vector.shape_cast %340 : vector<8x32xf32> to vector<1x8x32xf32>
    %342 = arith.index_cast %299 : i32 to index
    %c0_102 = arith.constant 0 : index
    %c32_103 = arith.constant 32 : index
    %343 = vector.load %arg4[%342, %c0_102, %c32_103] : memref<8x8x64xf32, #tpu.memory_space<vmem>>, vector<1x8x32xf32>
    tpu.vector_store %arg4[%342, %c0_102, %c32_103], %341 {strides = array<i32>} : memref<8x8x64xf32, #tpu.memory_space<vmem>>, vector<1x8x32xf32>,
    %c7_i32_104 = arith.constant 7 : i32
    %c7_i32_105 = arith.constant 7 : i32
    %344 = arith.subi %c7_i32_105, %c7_i32_104 : i32
    %c8_i32_106 = arith.constant 8 : i32
    %345 = arith.muli %c7_i32_104, %c8_i32_106 : i32
    %346 = tpu.assume_multiple %345, 8 : i32
    %347 = arith.index_cast %346 : i32 to index
    %c0_107 = arith.constant 0 : index
    %348 = vector.load %arg5[%347, %c0_107] : memref<64x256xf32, #tpu.memory_space<vmem>>, vector<8x256xf32>
    %c8_i32_108 = arith.constant 8 : i32
    %349 = arith.muli %344, %c8_i32_108 : i32
    %350 = tpu.assume_multiple %349, 8 : i32
    %351 = arith.index_cast %350 : i32 to index
    %c0_109 = arith.constant 0 : index
    %352 = vector.load %arg5[%351, %c0_109] : memref<64x256xf32, #tpu.memory_space<vmem>>, vector<8x256xf32>
    %353 = arith.select %26, %348, %352 : vector<8x256xi1>, vector<8x256xf32>
    %cst_110 = arith.constant dense<0.000000e+00> : vector<8x256xf32>
    %354 = tpu.matmul %335, %7, %cst_110 {dimension_numbers = #tpu.dot_dimension_numbers<[1], [0], [0], [1], [0, 0, 1, 1], [], []>} : vector<8x64xf32>, vector<64x256xf32>, vector<8x256xf32> -> vector<8x256xf32>
    %355 = arith.addf %353, %354 : vector<8x256xf32>
    %356 = vector.extract_strided_slice %355 {offsets = [0, 0], sizes = [8, 64], strides = [1, 1]} : vector<8x256xf32> to vector<8x64xf32>
    %357 = arith.negf %356 : vector<8x64xf32>
    %358 = math.exp %357 : vector<8x64xf32>
    %cst_111 = arith.constant 1.000000e+00 : f32
    %359 = vector.broadcast %cst_111 : f32 to vector<8x64xf32>
    %360 = arith.addf %359, %358 : vector<8x64xf32>
    %361 = arith.divf %359, %360 : vector<8x64xf32>
    %362 = vector.extract_strided_slice %355 {offsets = [0, 64], sizes = [8, 64], strides = [1, 1]} : vector<8x256xf32> to vector<8x64xf32>
    %363 = arith.negf %362 : vector<8x64xf32>
    %364 = math.exp %363 : vector<8x64xf32>
    %cst_112 = arith.constant 1.000000e+00 : f32
    %365 = vector.broadcast %cst_112 : f32 to vector<8x64xf32>
    %366 = arith.addf %365, %364 : vector<8x64xf32>
    %367 = arith.divf %365, %366 : vector<8x64xf32>
    %368 = vector.extract_strided_slice %355 {offsets = [0, 128], sizes = [8, 64], strides = [1, 1]} : vector<8x256xf32> to vector<8x64xf32>
    %369 = math.tanh %368 : vector<8x64xf32>
    %370 = vector.extract_strided_slice %355 {offsets = [0, 192], sizes = [8, 64], strides = [1, 1]} : vector<8x256xf32> to vector<8x64xf32>
    %371 = arith.negf %370 : vector<8x64xf32>
    %372 = math.exp %371 : vector<8x64xf32>
    %cst_113 = arith.constant 1.000000e+00 : f32
    %373 = vector.broadcast %cst_113 : f32 to vector<8x64xf32>
    %374 = arith.addf %373, %372 : vector<8x64xf32>
    %375 = arith.divf %373, %374 : vector<8x64xf32>
    %376 = arith.mulf %367, %333 : vector<8x64xf32>
    %377 = arith.mulf %361, %369 : vector<8x64xf32>
    %378 = arith.addf %376, %377 : vector<8x64xf32>
    %379 = math.tanh %378 : vector<8x64xf32>
    %380 = arith.mulf %375, %379 : vector<8x64xf32>
    %381 = vector.extract_strided_slice %380 {offsets = [0, 0], sizes = [8, 32], strides = [1, 1]} : vector<8x64xf32> to vector<8x32xf32>
    %382 = vector.shape_cast %381 : vector<8x32xf32> to vector<1x8x32xf32>
    %383 = arith.index_cast %c7_i32_104 : i32 to index
    %c0_114 = arith.constant 0 : index
    %c0_115 = arith.constant 0 : index
    %384 = vector.load %arg4[%383, %c0_114, %c0_115] : memref<8x8x64xf32, #tpu.memory_space<vmem>>, vector<1x8x32xf32>
    tpu.vector_store %arg4[%383, %c0_114, %c0_115], %382 {strides = array<i32>} : memref<8x8x64xf32, #tpu.memory_space<vmem>>, vector<1x8x32xf32>,
    %385 = vector.extract_strided_slice %380 {offsets = [0, 32], sizes = [8, 32], strides = [1, 1]} : vector<8x64xf32> to vector<8x32xf32>
    %386 = vector.shape_cast %385 : vector<8x32xf32> to vector<1x8x32xf32>
    %387 = arith.index_cast %344 : i32 to index
    %c0_116 = arith.constant 0 : index
    %c32_117 = arith.constant 32 : index
    %388 = vector.load %arg4[%387, %c0_116, %c32_117] : memref<8x8x64xf32, #tpu.memory_space<vmem>>, vector<1x8x32xf32>
    tpu.vector_store %arg4[%387, %c0_116, %c32_117], %386 {strides = array<i32>} : memref<8x8x64xf32, #tpu.memory_space<vmem>>, vector<1x8x32xf32>,
    %c8_i32_118 = arith.constant 8 : i32
    return
  }
}

</mosaic_0001>

<llo_original>
// kernel: bilstm_block_forward.1
$region0: #{bilstm_block_forward.1}
  #allocation0 [shape = 'u32[]', space=smem, size = 0x4, offset = 0x4, fixed_abs, tag = 'smem constant byte address 0x4 - core index']
  #allocation1 [shape = 'u32[144,128]{1,0:T(1,128)}', space=vmem, size = 0x12000, scoped, tag = 'internal scratch']
  #allocation2 [shape = 'f32[64,256]{1,0:T(8,128)}', space=vmem, size = 0x10000, scoped, tag = 'scratch operand']
  %s0 = inlined_call_operand.vmem [shape: f32[64,16], index: 0, kind: input, shape index: {}]
  %s1 = inlined_call_operand.vmem [shape: f32[16,256], index: 1, kind: input, shape index: {}]
  %s2 = inlined_call_operand.vmem [shape: f32[64,256], index: 2, kind: input, shape index: {}]
  %s3 = inlined_call_operand.vmem [shape: f32[1,256], index: 3, kind: input, shape index: {}]
  %s4 = inlined_call_operand.vmem [shape: f32[8,8,64], index: 4, kind: output, shape index: {}]
  %s5 = sld [smem:[#allocation0]]
  $region26: #{bilstm_block_forward.1} parent=0
    _
  %s7 = ssub.s32 1, %s5
  %s8 = scalar_select 0, %s7, %s5
  // Predicated region
  $region2: #{bilstm_block_forward.1} parent=0 // pred_check
    _
  $region3: #{bilstm_block_forward.1} parent=0 // pred_check_branch
    %10 = sbr.rel (0) target = $region5
  $region4: #{bilstm_block_forward.1} parent=0 // pred_region
    _
  $region5: #{bilstm_block_forward.1} parent=0 // pred_fallthru
    _
  // Predicated region
  $region6: #{bilstm_block_forward.1} parent=0 // pred_check
    _
  $region7: #{bilstm_block_forward.1} parent=0 // pred_check_branch
    %12 = sbr.rel (0) target = $region9
  $region8: #{bilstm_block_forward.1} parent=0 // pred_region
    _
  $region9: #{bilstm_block_forward.1} parent=0 // pred_fallthru
    _
  // Predicated region
  $region10: #{bilstm_block_forward.1} parent=0 // pred_check
    _
  $region11: #{bilstm_block_forward.1} parent=0 // pred_check_branch
    %14 = sbr.rel (0) target = $region13
  $region12: #{bilstm_block_forward.1} parent=0 // pred_region
    _
  $region13: #{bilstm_block_forward.1} parent=0 // pred_fallthru
    _
  // Predicated region
  $region14: #{bilstm_block_forward.1} parent=0 // pred_check
    _
  $region15: #{bilstm_block_forward.1} parent=0 // pred_check_branch
    %16 = sbr.rel (0) target = $region17
  $region16: #{bilstm_block_forward.1} parent=0 // pred_region
    _
  $region17: #{bilstm_block_forward.1} parent=0 // pred_fallthru
    _
  %v17 = vld [vmem:[%s0] sm:$0xff]
  %v18 = vld [vmem:[%s0 + $0x8] sm:$0xff]
  %v19 = vld [vmem:[%s0 + $0x10] sm:$0xff]
  %v20 = vld [vmem:[%s0 + $0x18] sm:$0xff]
  %v21 = vld [vmem:[%s0 + $0x20] sm:$0xff]
  %v22 = vld [vmem:[%s0 + $0x28] sm:$0xff]
  %v23 = vld [vmem:[%s0 + $0x30] sm:$0xff]
  %v24 = vld [vmem:[%s0 + $0x38] sm:$0xff]
  %v25 = vld [vmem:[%s1] sm:$0xff]
  %v26 = vld [vmem:[%s1 + $0x8] sm:$0xff]
  %v27 = vld [vmem:[%s1 + $0x10] sm:$0xff]
  %v28 = vld [vmem:[%s1 + $0x18] sm:$0xff]
  %v29 = vld [vmem:[%s3] sm:$0x3]
  %v31 = vlaneseq
  %v32 = vshrl.u32 %v31, 7
  %v33 = vsub.s32 0, %v32
  %v34 = vrot.slane %v29, %v33
  %v35 = vlaneseq
  %v36 = vshrl.u32 %v35, 7
  %v37 = vsub.s32 1, %v36
  %v38 = vrot.slane %v29, %v37
  %vm41 = vcmask 130048
  %v43 = vsel %vm41, %v17, 0
  %v46 = vsel %vm41, %v18, 0
  %v49 = vsel %vm41, %v19, 0
  %v52 = vsel %vm41, %v20, 0
  %v55 = vsel %vm41, %v21, 0
  %v58 = vsel %vm41, %v22, 0
  %v61 = vsel %vm41, %v23, 0
  %v64 = vsel %vm41, %v24, 0
  %66 = vmatprep.subr.mxu0 %v26
  %67 = vmatpush1.msra.mxu0 %v25
  %68 = vmatprep.subr.mxu0 %v28
  %69 = vmatpush1.msra.mxu0 %v27
  %70 = vmatprep.subr.mxu0 0.0
  %71 = vmatpush1.msra.mxu0 0.0
  %72 = vmatprep.subr.mxu0 0.0
  %73 = vmatpush1.msra.mxu0 0.0
  %74 = vmatprep.subr.mxu0 0.0
  %75 = vmatpush1.msra.mxu0 0.0
  %76 = vmatprep.subr.mxu0 0.0
  %77 = vmatpush1.msra.mxu0 0.0
  %78 = vmatprep.subr.mxu0 0.0
  %79 = vmatpush1.msra.mxu0 0.0
  %80 = vmatprep.subr.mxu0 0.0
  %81 = vmatpush1.msra.mxu0 0.0
  %82 = vmatprep.subr.mxu0 0.0
  %83 = vmatpush1.msra.mxu0 0.0
  %84 = vmatprep.subr.mxu0 0.0
  %85 = vmatpush1.msra.mxu0 0.0
  %86 = vmatprep.subr.mxu0 0.0
  %87 = vmatpush1.msra.mxu0 0.0
  %88 = vmatprep.subr.mxu0 0.0
  %89 = vmatpush1.msra.mxu0 0.0
  %90 = vmatprep.subr.mxu0 0.0
  %91 = vmatpush1.msra.mxu0 0.0
  %92 = vmatprep.subr.mxu0 0.0
  %93 = vmatpush1.msra.mxu0 0.0
  %94 = vmatprep.subr.mxu0 0.0
  %95 = vmatpush1.msra.mxu0 0.0
  %96 = vmatprep.subr.mxu0 0.0
  %97 = vmatpush1.msra.mxu0 0.0
  %98 = vmatprep.subr.mxu0 0.0
  %99 = vmatpush1.msra.mxu0 0.0
  %100 = vmatprep.subr.mxu0 0.0
  %101 = vmatpush1.msra.mxu0 0.0
  %102 = vmatprep.subr.mxu0 0.0
  %103 = vmatpush1.msra.mxu0 0.0
  %104 = vmatprep.subr.mxu0 0.0
  %105 = vmatpush1.msra.mxu0 0.0
  %106 = vmatprep.subr.mxu0 0.0
  %107 = vmatpush1.msra.mxu0 0.0
  %108 = vmatprep.subr.mxu0 0.0
  %109 = vmatpush1.msra.mxu0 0.0
  %110 = vmatprep.subr.mxu0 0.0
  %111 = vmatpush1.msra.mxu0 0.0
  %112 = vmatprep.subr.mxu0 0.0
  %113 = vmatpush1.msra.mxu0 0.0
  %114 = vmatprep.subr.mxu0 0.0
  %115 = vmatpush1.msra.mxu0 0.0
  %116 = vmatprep.subr.mxu0 0.0
  %117 = vmatpush1.msra.mxu0 0.0
  %118 = vmatprep.subr.mxu0 0.0
  %119 = vmatpush1.msra.mxu0 0.0
  %120 = vmatprep.subr.mxu0 0.0
  %121 = vmatpush1.msra.mxu0 0.0
  %122 = vmatprep.subr.mxu0 0.0
  %123 = vmatpush1.msra.mxu0 0.0
  %124 = vmatprep.subr.mxu0 0.0
  %125 = vmatpush1.msra.mxu0 0.0
  %126 = vmatprep.subr.mxu0 0.0
  %127 = vmatpush1.msra.mxu0 0.0
  %128 = vmatprep.subr.mxu0 0.0
  %129 = vmatpush1.msra.mxu0 0.0
  %130 = vmatprep.mubr.f32.mxu0 0.0
  %131 = vmatmul.mubr.f32.gmra.mrb[0].mxu0 %v43
  %v132 = vpop.f32.mrb[0].mxu0
  %v133 = vadd.f32 %v34, %v132
  %v134 = vpop.f32.mrb[0].mxu0
  %v135 = vadd.f32 %v38, %v134
  %136 = vmatprep.mubr.f32.mxu0 0.0
  %137 = vmatmul.mubr.f32.gmra.mrb[0].mxu0 %v46
  %v138 = vpop.f32.mrb[0].mxu0
  %v139 = vadd.f32 %v34, %v138
  %v140 = vpop.f32.mrb[0].mxu0
  %v141 = vadd.f32 %v38, %v140
  %142 = vmatprep.mubr.f32.mxu0 0.0
  %143 = vmatmul.mubr.f32.gmra.mrb[0].mxu0 %v49
  %v144 = vpop.f32.mrb[0].mxu0
  %v145 = vadd.f32 %v34, %v144
  %v146 = vpop.f32.mrb[0].mxu0
  %v147 = vadd.f32 %v38, %v146
  %148 = vmatprep.mubr.f32.mxu0 0.0
  %149 = vmatmul.mubr.f32.gmra.mrb[0].mxu0 %v52
  %v150 = vpop.f32.mrb[0].mxu0
  %v151 = vadd.f32 %v34, %v150
  %v152 = vpop.f32.mrb[0].mxu0
  %v153 = vadd.f32 %v38, %v152
  %154 = vmatprep.mubr.f32.mxu0 0.0
  %155 = vmatmul.mubr.f32.gmra.mrb[0].mxu0 %v55
  %v156 = vpop.f32.mrb[0].mxu0
  %v157 = vadd.f32 %v34, %v156
  %v158 = vpop.f32.mrb[0].mxu0
  %v159 = vadd.f32 %v38, %v158
  %160 = vmatprep.mubr.f32.mxu0 0.0
  %161 = vmatmul.mubr.f32.gmra.mrb[0].mxu0 %v58
  %v162 = vpop.f32.mrb[0].mxu0
  %v163 = vadd.f32 %v34, %v162
  %v164 = vpop.f32.mrb[0].mxu0
  %v165 = vadd.f32 %v38, %v164
  %166 = vmatprep.mubr.f32.mxu0 0.0
  %167 = vmatmul.mubr.f32.gmra.mrb[0].mxu0 %v61
  %v168 = vpop.f32.mrb[0].mxu0
  %v169 = vadd.f32 %v34, %v168
  %v170 = vpop.f32.mrb[0].mxu0
  %v171 = vadd.f32 %v38, %v170
  %172 = vmatprep.mubr.f32.mxu0 0.0
  %173 = vmatmul.mubr.f32.gmra.mrb[0].mxu0 %v64
  %v174 = vpop.f32.mrb[0].mxu0
  %v175 = vadd.f32 %v34, %v174
  %v176 = vpop.f32.mrb[0].mxu0
  %v177 = vadd.f32 %v38, %v176
  %178 = vdwg.mxu0
  %179 = vst [vmem:[#allocation2] sm:$0xff] %v133
  %180 = vst [vmem:[#allocation2 + $0x8] sm:$0xff] %v135
  %181 = vst [vmem:[#allocation2 + $0x10] sm:$0xff] %v139
  %182 = vst [vmem:[#allocation2 + $0x18] sm:$0xff] %v141
  %183 = vst [vmem:[#allocation2 + $0x20] sm:$0xff] %v145
  %184 = vst [vmem:[#allocation2 + $0x28] sm:$0xff] %v147
  %185 = vst [vmem:[#allocation2 + $0x30] sm:$0xff] %v151
  %186 = vst [vmem:[#allocation2 + $0x38] sm:$0xff] %v153
  %187 = vst [vmem:[#allocation2 + $0x40] sm:$0xff] %v157
  %188 = vst [vmem:[#allocation2 + $0x48] sm:$0xff] %v159
  %189 = vst [vmem:[#allocation2 + $0x50] sm:$0xff] %v163
  %190 = vst [vmem:[#allocation2 + $0x58] sm:$0xff] %v165
  %191 = vst [vmem:[#allocation2 + $0x60] sm:$0xff] %v169
  %192 = vst [vmem:[#allocation2 + $0x68] sm:$0xff] %v171
  %193 = vst [vmem:[#allocation2 + $0x70] sm:$0xff] %v175
  %194 = vst [vmem:[#allocation2 + $0x78] sm:$0xff] %v177
  %v195 = vld [vmem:[%s2] sm:$0xff]
  %v196 = vld [vmem:[%s2 + $0x8] sm:$0xff]
  %v197 = vld [vmem:[%s2 + $0x10] sm:$0xff]
  %v198 = vld [vmem:[%s2 + $0x18] sm:$0xff]
  %v199 = vld [vmem:[%s2 + $0x20] sm:$0xff]
  %v200 = vld [vmem:[%s2 + $0x28] sm:$0xff]
  %v201 = vld [vmem:[%s2 + $0x30] sm:$0xff]
  %v202 = vld [vmem:[%s2 + $0x38] sm:$0xff]
  %v203 = vld [vmem:[%s2 + $0x40] sm:$0xff]
  %v204 = vld [vmem:[%s2 + $0x48] sm:$0xff]
  %v205 = vld [vmem:[%s2 + $0x50] sm:$0xff]
  %v206 = vld [vmem:[%s2 + $0x58] sm:$0xff]
  %v207 = vld [vmem:[%s2 + $0x60] sm:$0xff]
  %v208 = vld [vmem:[%s2 + $0x68] sm:$0xff]
  %v209 = vld [vmem:[%s2 + $0x70] sm:$0xff]
  %v210 = vld [vmem:[%s2 + $0x78] sm:$0xff]
  %v211 = vlaneseq
  %v212 = vand.u32 %v211, 127
  %v213 = vadd.s32 %v212, 128
  %vm214 = vcmp.lt.s32.totalorder %v212, 0
  %v215 = vsub.s32 0, %v212
  %v216 = vsel %vm214, %v215, %v212
  %v217 = vshrl.u32 %v216, 6
  %v218 = vand.u32 %v216, 63
  %v219 = vsub.s32 0, %v218
  %v220 = vsel %vm214, %v219, %v218
  %vm221 = vcmp.lt.s32.totalorder %v213, 0
  %v222 = vsub.s32 0, %v213
  %v223 = vsel %vm221, %v222, %v213
  %v224 = vshrl.u32 %v223, 6
  %v225 = vand.u32 %v223, 63
  %v226 = vsub.s32 0, %v225
  %v227 = vsel %vm221, %v226, %v225
  %vm228 = vcmp.ne.s32.totalorder %v220, 0
  %vm229 = vcmp.ne.s32.totalorder %v227, 0
  %vm230 = vcmp.lt.s32.totalorder %v220, 0
  %vm231 = vcmp.lt.s32.totalorder %v227, 0
  %vm232 = vmand %vm230, %vm228
  %vm233 = vmand %vm231, %vm229
  %v234 = vadd.s32 %v220, 64
  %v235 = vadd.s32 %v227, 64
  %v236 = vsel %vm232, %v234, %v220
  %v237 = vsel %vm233, %v235, %v227
  %vm238 = vcmp.lt.s32.totalorder %v236, 32
  %vm239 = vcmp.lt.s32.totalorder %v237, 32
  %s240 = smul.u32 0, 2
  %s241 = smul.addr %s240, 8
  %s242 = scalar_lea.vmem [#allocation2], %s241
  %v243 = vld [vmem:[%s242] sm:$0xff]
  %v244 = vld [vmem:[%s242 + $0x8] sm:$0xff]
  %s245 = smul.u32 7, 2
  %s246 = smul.addr %s245, 8
  %s247 = scalar_lea.vmem [#allocation2], %s246
  %v248 = vld [vmem:[%s247] sm:$0xff]
  %v249 = vld [vmem:[%s247 + $0x8] sm:$0xff]
  %v250 = vsel %vm238, %v243, %v248
  %v251 = vsel %vm239, %v244, %v249
  %vm252 = vcmask 523264
  %v254 = vsel %vm252, 0.0, 0
  %256 = vmatprep.subr.mxu0 %v196
  %257 = vmatpush1.msra.mxu0 %v195
  %258 = vmatprep.subr.mxu0 %v198
  %259 = vmatpush1.msra.mxu0 %v197
  %260 = vmatprep.subr.mxu0 %v200
  %261 = vmatpush1.msra.mxu0 %v199
  %262 = vmatprep.subr.mxu0 %v202
  %263 = vmatpush1.msra.mxu0 %v201
  %264 = vmatprep.subr.mxu0 %v204
  %265 = vmatpush1.msra.mxu0 %v203
  %266 = vmatprep.subr.mxu0 %v206
  %267 = vmatpush1.msra.mxu0 %v205
  %268 = vmatprep.subr.mxu0 %v208
  %269 = vmatpush1.msra.mxu0 %v207
  %270 = vmatprep.subr.mxu0 %v210
  %271 = vmatpush1.msra.mxu0 %v209
  %272 = vmatprep.subr.mxu0 0.0
  %273 = vmatpush1.msra.mxu0 0.0
  %274 = vmatprep.subr.mxu0 0.0
  %275 = vmatpush1.msra.mxu0 0.0
  %276 = vmatprep.subr.mxu0 0.0
  %277 = vmatpush1.msra.mxu0 0.0
  %278 = vmatprep.subr.mxu0 0.0
  %279 = vmatpush1.msra.mxu0 0.0
  %280 = vmatprep.subr.mxu0 0.0
  %281 = vmatpush1.msra.mxu0 0.0
  %282 = vmatprep.subr.mxu0 0.0
  %283 = vmatpush1.msra.mxu0 0.0
  %284 = vmatprep.subr.mxu0 0.0
  %285 = vmatpush1.msra.mxu0 0.0
  %286 = vmatprep.subr.mxu0 0.0
  %287 = vmatpush1.msra.mxu0 0.0
  %288 = vmatprep.subr.mxu0 0.0
  %289 = vmatpush1.msra.mxu0 0.0
  %290 = vmatprep.subr.mxu0 0.0
  %291 = vmatpush1.msra.mxu0 0.0
  %292 = vmatprep.subr.mxu0 0.0
  %293 = vmatpush1.msra.mxu0 0.0
  %294 = vmatprep.subr.mxu0 0.0
  %295 = vmatpush1.msra.mxu0 0.0
  %296 = vmatprep.subr.mxu0 0.0
  %297 = vmatpush1.msra.mxu0 0.0
  %298 = vmatprep.subr.mxu0 0.0
  %299 = vmatpush1.msra.mxu0 0.0
  %300 = vmatprep.subr.mxu0 0.0
  %301 = vmatpush1.msra.mxu0 0.0
  %302 = vmatprep.subr.mxu0 0.0
  %303 = vmatpush1.msra.mxu0 0.0
  %304 = vmatprep.subr.mxu0 0.0
  %305 = vmatpush1.msra.mxu0 0.0
  %306 = vmatprep.subr.mxu0 0.0
  %307 = vmatpush1.msra.mxu0 0.0
  %308 = vmatprep.subr.mxu0 0.0
  %309 = vmatpush1.msra.mxu0 0.0
  %310 = vmatprep.subr.mxu0 0.0
  %311 = vmatpush1.msra.mxu0 0.0
  %312 = vmatprep.subr.mxu0 0.0
  %313 = vmatpush1.msra.mxu0 0.0
  %314 = vmatprep.subr.mxu0 0.0
  %315 = vmatpush1.msra.mxu0 0.0
  %316 = vmatprep.subr.mxu0 0.0
  %317 = vmatpush1.msra.mxu0 0.0
  %318 = vmatprep.subr.mxu0 0.0
  %319 = vmatpush1.msra.mxu0 0.0
  %320 = vmatprep.mubr.f32.mxu0 0.0
  %321 = vmatmul.mubr.f32.gmra.mrb[0].mxu0 %v254
  %v322 = vpop.f32.mrb[0].mxu0
  %v323 = vadd.f32 0.0, %v322
  %v324 = vpop.f32.mrb[0].mxu0
  %v325 = vadd.f32 0.0, %v324
  %326 = vdwg.mxu0
  %v327 = vadd.f32 %v250, %v323
  %v328 = vadd.f32 %v251, %v325
  %v329 = vxor.u32 %v327, 2147483648
  %v330 = vmul.f32 %v329, 1.442695
  %v331 = vpow.pop %v330
  %v332 = vadd.f32 %v331, 1.0
  %v333 = vrcp.pop %v332
  %v334 = vmul.f32 1.0, %v333
  %v335 = vtanh.pop %v328
  %v336 = vxor.u32 %v328, 2147483648
  %v337 = vmul.f32 %v336, 1.442695
  %v338 = vpow.pop %v337
  %v339 = vadd.f32 %v338, 1.0
  %v340 = vrcp.pop %v339
  %v341 = vmul.f32 1.0, %v340
  %v342 = vmul.f32 %v334, 0.0
  %v343 = vmul.f32 %v334, %v335
  %345 = vrot.lane.b32.xlu0 %v343, 64
  %v346 = vpop.permute.xlu0 %345
  %v348 = vadd.f32 %v342, %v346
  %v349 = vtanh.pop %v348
  %v350 = vmul.f32 %v341, %v349
  %352 = vrot.lane.b32.xlu0 %v350, 64
  %v353 = vpop.permute.xlu0 %352
  %vm355 = vcmask 261120
  %356 = vst.msk [vmem:[%s4] sm:$0xff] %vm355, %v353
  %s357 = scalar_lea.vmem %s4, 56
  %vm358 = vcmask 523520
  %359 = vst.msk [vmem:[%s357] sm:$0xff] %vm358, %v353
  %s360 = smul.u32 1, 2
  %s361 = smul.addr %s360, 8
  %s362 = scalar_lea.vmem [#allocation2], %s361
  %v363 = vld [vmem:[%s362] sm:$0xff]
  %v364 = vld [vmem:[%s362 + $0x8] sm:$0xff]
  %s365 = smul.u32 6, 2
  %s366 = smul.addr %s365, 8
  %s367 = scalar_lea.vmem [#allocation2], %s366
  %v368 = vld [vmem:[%s367] sm:$0xff]
  %v369 = vld [vmem:[%s367 + $0x8] sm:$0xff]
  %v370 = vsel %vm238, %v363, %v368
  %v371 = vsel %vm239, %v364, %v369
  %v372 = vsel %vm252, %v353, 0
  %374 = vmatprep.subr.mxu0 %v196
  %375 = vmatpush1.msra.mxu0 %v195
  %376 = vmatprep.subr.mxu0 %v198
  %377 = vmatpush1.msra.mxu0 %v197
  %378 = vmatprep.subr.mxu0 %v200
  %379 = vmatpush1.msra.mxu0 %v199
  %380 = vmatprep.subr.mxu0 %v202
  %381 = vmatpush1.msra.mxu0 %v201
  %382 = vmatprep.subr.mxu0 %v204
  %383 = vmatpush1.msra.mxu0 %v203
  %384 = vmatprep.subr.mxu0 %v206
  %385 = vmatpush1.msra.mxu0 %v205
  %386 = vmatprep.subr.mxu0 %v208
  %387 = vmatpush1.msra.mxu0 %v207
  %388 = vmatprep.subr.mxu0 %v210
  %389 = vmatpush1.msra.mxu0 %v209
  %390 = vmatprep.subr.mxu0 0.0
  %391 = vmatpush1.msra.mxu0 0.0
  %392 = vmatprep.subr.mxu0 0.0
  %393 = vmatpush1.msra.mxu0 0.0
  %394 = vmatprep.subr.mxu0 0.0
  %395 = vmatpush1.msra.mxu0 0.0
  %396 = vmatprep.subr.mxu0 0.0
  %397 = vmatpush1.msra.mxu0 0.0
  %398 = vmatprep.subr.mxu0 0.0
  %399 = vmatpush1.msra.mxu0 0.0
  %400 = vmatprep.subr.mxu0 0.0
  %401 = vmatpush1.msra.mxu0 0.0
  %402 = vmatprep.subr.mxu0 0.0
  %403 = vmatpush1.msra.mxu0 0.0
  %404 = vmatprep.subr.mxu0 0.0
  %405 = vmatpush1.msra.mxu0 0.0
  %406 = vmatprep.subr.mxu0 0.0
  %407 = vmatpush1.msra.mxu0 0.0
  %408 = vmatprep.subr.mxu0 0.0
  %409 = vmatpush1.msra.mxu0 0.0
  %410 = vmatprep.subr.mxu0 0.0
  %411 = vmatpush1.msra.mxu0 0.0
  %412 = vmatprep.subr.mxu0 0.0
  %413 = vmatpush1.msra.mxu0 0.0
  %414 = vmatprep.subr.mxu0 0.0
  %415 = vmatpush1.msra.mxu0 0.0
  %416 = vmatprep.subr.mxu0 0.0
  %417 = vmatpush1.msra.mxu0 0.0
  %418 = vmatprep.subr.mxu0 0.0
  %419 = vmatpush1.msra.mxu0 0.0
  %420 = vmatprep.subr.mxu0 0.0
  %421 = vmatpush1.msra.mxu0 0.0
  %422 = vmatprep.subr.mxu0 0.0
  %423 = vmatpush1.msra.mxu0 0.0
  %424 = vmatprep.subr.mxu0 0.0
  %425 = vmatpush1.msra.mxu0 0.0
  %426 = vmatprep.subr.mxu0 0.0
  %427 = vmatpush1.msra.mxu0 0.0
  %428 = vmatprep.subr.mxu0 0.0
  %429 = vmatpush1.msra.mxu0 0.0
  %430 = vmatprep.subr.mxu0 0.0
  %431 = vmatpush1.msra.mxu0 0.0
  %432 = vmatprep.subr.mxu0 0.0
  %433 = vmatpush1.msra.mxu0 0.0
  %434 = vmatprep.subr.mxu0 0.0
  %435 = vmatpush1.msra.mxu0 0.0
  %436 = vmatprep.subr.mxu0 0.0
  %437 = vmatpush1.msra.mxu0 0.0
  %438 = vmatprep.mubr.f32.mxu0 0.0
  %439 = vmatmul.mubr.f32.gmra.mrb[0].mxu0 %v372
  %v440 = vpop.f32.mrb[0].mxu0
  %v441 = vadd.f32 0.0, %v440
  %v442 = vpop.f32.mrb[0].mxu0
  %v443 = vadd.f32 0.0, %v442
  %444 = vdwg.mxu0
  %v445 = vadd.f32 %v370, %v441
  %v446 = vadd.f32 %v371, %v443
  %v447 = vxor.u32 %v445, 2147483648
  %v448 = vmul.f32 %v447, 1.442695
  %v449 = vpow.pop %v448
  %v450 = vadd.f32 %v449, 1.0
  %v451 = vrcp.pop %v450
  %v452 = vmul.f32 1.0, %v451
  %v453 = vtanh.pop %v446
  %v454 = vxor.u32 %v446, 2147483648
  %v455 = vmul.f32 %v454, 1.442695
  %v456 = vpow.pop %v455
  %v457 = vadd.f32 %v456, 1.0
  %v458 = vrcp.pop %v457
  %v459 = vmul.f32 1.0, %v458
  %v460 = vmul.f32 %v452, %v348
  %v461 = vmul.f32 %v452, %v453
  %463 = vrot.lane.b32.xlu0 %v461, 64
  %v464 = vpop.permute.xlu0 %463
  %v466 = vadd.f32 %v460, %v464
  %v467 = vtanh.pop %v466
  %v468 = vmul.f32 %v459, %v467
  %470 = vrot.lane.b32.xlu0 %v468, 64
  %v471 = vpop.permute.xlu0 %470
  %s473 = scalar_lea.vmem %s4, 8
  %474 = vst.msk [vmem:[%s473] sm:$0xff] %vm355, %v471
  %s475 = scalar_lea.vmem %s4, 48
  %476 = vst.msk [vmem:[%s475] sm:$0xff] %vm358, %v471
  %s477 = smul.u32 2, 2
  %s478 = smul.addr %s477, 8
  %s479 = scalar_lea.vmem [#allocation2], %s478
  %v480 = vld [vmem:[%s479] sm:$0xff]
  %v481 = vld [vmem:[%s479 + $0x8] sm:$0xff]
  %s482 = smul.u32 5, 2
  %s483 = smul.addr %s482, 8
  %s484 = scalar_lea.vmem [#allocation2], %s483
  %v485 = vld [vmem:[%s484] sm:$0xff]
  %v486 = vld [vmem:[%s484 + $0x8] sm:$0xff]
  %v487 = vsel %vm238, %v480, %v485
  %v488 = vsel %vm239, %v481, %v486
  %v489 = vsel %vm252, %v471, 0
  %491 = vmatprep.subr.mxu0 %v196
  %492 = vmatpush1.msra.mxu0 %v195
  %493 = vmatprep.subr.mxu0 %v198
  %494 = vmatpush1.msra.mxu0 %v197
  %495 = vmatprep.subr.mxu0 %v200
  %496 = vmatpush1.msra.mxu0 %v199
  %497 = vmatprep.subr.mxu0 %v202
  %498 = vmatpush1.msra.mxu0 %v201
  %499 = vmatprep.subr.mxu0 %v204
  %500 = vmatpush1.msra.mxu0 %v203
  %501 = vmatprep.subr.mxu0 %v206
  %502 = vmatpush1.msra.mxu0 %v205
  %503 = vmatprep.subr.mxu0 %v208
  %504 = vmatpush1.msra.mxu0 %v207
  %505 = vmatprep.subr.mxu0 %v210
  %506 = vmatpush1.msra.mxu0 %v209
  %507 = vmatprep.subr.mxu0 0.0
  %508 = vmatpush1.msra.mxu0 0.0
  %509 = vmatprep.subr.mxu0 0.0
  %510 = vmatpush1.msra.mxu0 0.0
  %511 = vmatprep.subr.mxu0 0.0
  %512 = vmatpush1.msra.mxu0 0.0
  %513 = vmatprep.subr.mxu0 0.0
  %514 = vmatpush1.msra.mxu0 0.0
  %515 = vmatprep.subr.mxu0 0.0
  %516 = vmatpush1.msra.mxu0 0.0
  %517 = vmatprep.subr.mxu0 0.0
  %518 = vmatpush1.msra.mxu0 0.0
  %519 = vmatprep.subr.mxu0 0.0
  %520 = vmatpush1.msra.mxu0 0.0
  %521 = vmatprep.subr.mxu0 0.0
  %522 = vmatpush1.msra.mxu0 0.0
  %523 = vmatprep.subr.mxu0 0.0
  %524 = vmatpush1.msra.mxu0 0.0
  %525 = vmatprep.subr.mxu0 0.0
  %526 = vmatpush1.msra.mxu0 0.0
  %527 = vmatprep.subr.mxu0 0.0
  %528 = vmatpush1.msra.mxu0 0.0
  %529 = vmatprep.subr.mxu0 0.0
  %530 = vmatpush1.msra.mxu0 0.0
  %531 = vmatprep.subr.mxu0 0.0
  %532 = vmatpush1.msra.mxu0 0.0
  %533 = vmatprep.subr.mxu0 0.0
  %534 = vmatpush1.msra.mxu0 0.0
  %535 = vmatprep.subr.mxu0 0.0
  %536 = vmatpush1.msra.mxu0 0.0
  %537 = vmatprep.subr.mxu0 0.0
  %538 = vmatpush1.msra.mxu0 0.0
  %539 = vmatprep.subr.mxu0 0.0
  %540 = vmatpush1.msra.mxu0 0.0
  %541 = vmatprep.subr.mxu0 0.0
  %542 = vmatpush1.msra.mxu0 0.0
  %543 = vmatprep.subr.mxu0 0.0
  %544 = vmatpush1.msra.mxu0 0.0
  %545 = vmatprep.subr.mxu0 0.0
  %546 = vmatpush1.msra.mxu0 0.0
  %547 = vmatprep.subr.mxu0 0.0
  %548 = vmatpush1.msra.mxu0 0.0
  %549 = vmatprep.subr.mxu0 0.0
  %550 = vmatpush1.msra.mxu0 0.0
  %551 = vmatprep.subr.mxu0 0.0
  %552 = vmatpush1.msra.mxu0 0.0
  %553 = vmatprep.subr.mxu0 0.0
  %554 = vmatpush1.msra.mxu0 0.0
  %555 = vmatprep.mubr.f32.mxu0 0.0
  %556 = vmatmul.mubr.f32.gmra.mrb[0].mxu0 %v489
  %v557 = vpop.f32.mrb[0].mxu0
  %v558 = vadd.f32 0.0, %v557
  %v559 = vpop.f32.mrb[0].mxu0
  %v560 = vadd.f32 0.0, %v559
  %561 = vdwg.mxu0
  %v562 = vadd.f32 %v487, %v558
  %v563 = vadd.f32 %v488, %v560
  %v564 = vxor.u32 %v562, 2147483648
  %v565 = vmul.f32 %v564, 1.442695
  %v566 = vpow.pop %v565
  %v567 = vadd.f32 %v566, 1.0
  %v568 = vrcp.pop %v567
  %v569 = vmul.f32 1.0, %v568
  %v570 = vtanh.pop %v563
  %v571 = vxor.u32 %v563, 2147483648
  %v572 = vmul.f32 %v571, 1.442695
  %v573 = vpow.pop %v572
  %v574 = vadd.f32 %v573, 1.0
  %v575 = vrcp.pop %v574
  %v576 = vmul.f32 1.0, %v575
  %v577 = vmul.f32 %v569, %v466
  %v578 = vmul.f32 %v569, %v570
  %580 = vrot.lane.b32.xlu0 %v578, 64
  %v581 = vpop.permute.xlu0 %580
  %v583 = vadd.f32 %v577, %v581
  %v584 = vtanh.pop %v583
  %v585 = vmul.f32 %v576, %v584
  %587 = vrot.lane.b32.xlu0 %v585, 64
  %v588 = vpop.permute.xlu0 %587
  %s590 = scalar_lea.vmem %s4, 16
  %591 = vst.msk [vmem:[%s590] sm:$0xff] %vm355, %v588
  %s592 = scalar_lea.vmem %s4, 40
  %593 = vst.msk [vmem:[%s592] sm:$0xff] %vm358, %v588
  %s594 = smul.u32 3, 2
  %s595 = smul.addr %s594, 8
  %s596 = scalar_lea.vmem [#allocation2], %s595
  %v597 = vld [vmem:[%s596] sm:$0xff]
  %v598 = vld [vmem:[%s596 + $0x8] sm:$0xff]
  %s599 = smul.u32 4, 2
  %s600 = smul.addr %s599, 8
  %s601 = scalar_lea.vmem [#allocation2], %s600
  %v602 = vld [vmem:[%s601] sm:$0xff]
  %v603 = vld [vmem:[%s601 + $0x8] sm:$0xff]
  %v604 = vsel %vm238, %v597, %v602
  %v605 = vsel %vm239, %v598, %v603
  %v606 = vsel %vm252, %v588, 0
  %608 = vmatprep.subr.mxu0 %v196
  %609 = vmatpush1.msra.mxu0 %v195
  %610 = vmatprep.subr.mxu0 %v198
  %611 = vmatpush1.msra.mxu0 %v197
  %612 = vmatprep.subr.mxu0 %v200
  %613 = vmatpush1.msra.mxu0 %v199
  %614 = vmatprep.subr.mxu0 %v202
  %615 = vmatpush1.msra.mxu0 %v201
  %616 = vmatprep.subr.mxu0 %v204
  %617 = vmatpush1.msra.mxu0 %v203
  %618 = vmatprep.subr.mxu0 %v206
  %619 = vmatpush1.msra.mxu0 %v205
  %620 = vmatprep.subr.mxu0 %v208
  %621 = vmatpush1.msra.mxu0 %v207
  %622 = vmatprep.subr.mxu0 %v210
  %623 = vmatpush1.msra.mxu0 %v209
  %624 = vmatprep.subr.mxu0 0.0
  %625 = vmatpush1.msra.mxu0 0.0
  %626 = vmatprep.subr.mxu0 0.0
  %627 = vmatpush1.msra.mxu0 0.0
  %628 = vmatprep.subr.mxu0 0.0
  %629 = vmatpush1.msra.mxu0 0.0
  %630 = vmatprep.subr.mxu0 0.0
  %631 = vmatpush1.msra.mxu0 0.0
  %632 = vmatprep.subr.mxu0 0.0
  %633 = vmatpush1.msra.mxu0 0.0
  %634 = vmatprep.subr.mxu0 0.0
  %635 = vmatpush1.msra.mxu0 0.0
  %636 = vmatprep.subr.mxu0 0.0
  %637 = vmatpush1.msra.mxu0 0.0
  %638 = vmatprep.subr.mxu0 0.0
  %639 = vmatpush1.msra.mxu0 0.0
  %640 = vmatprep.subr.mxu0 0.0
  %641 = vmatpush1.msra.mxu0 0.0
  %642 = vmatprep.subr.mxu0 0.0
  %643 = vmatpush1.msra.mxu0 0.0
  %644 = vmatprep.subr.mxu0 0.0
  %645 = vmatpush1.msra.mxu0 0.0
  %646 = vmatprep.subr.mxu0 0.0
  %647 = vmatpush1.msra.mxu0 0.0
  %648 = vmatprep.subr.mxu0 0.0
  %649 = vmatpush1.msra.mxu0 0.0
  %650 = vmatprep.subr.mxu0 0.0
  %651 = vmatpush1.msra.mxu0 0.0
  %652 = vmatprep.subr.mxu0 0.0
  %653 = vmatpush1.msra.mxu0 0.0
  %654 = vmatprep.subr.mxu0 0.0
  %655 = vmatpush1.msra.mxu0 0.0
  %656 = vmatprep.subr.mxu0 0.0
  %657 = vmatpush1.msra.mxu0 0.0
  %658 = vmatprep.subr.mxu0 0.0
  %659 = vmatpush1.msra.mxu0 0.0
  %660 = vmatprep.subr.mxu0 0.0
  %661 = vmatpush1.msra.mxu0 0.0
  %662 = vmatprep.subr.mxu0 0.0
  %663 = vmatpush1.msra.mxu0 0.0
  %664 = vmatprep.subr.mxu0 0.0
  %665 = vmatpush1.msra.mxu0 0.0
  %666 = vmatprep.subr.mxu0 0.0
  %667 = vmatpush1.msra.mxu0 0.0
  %668 = vmatprep.subr.mxu0 0.0
  %669 = vmatpush1.msra.mxu0 0.0
  %670 = vmatprep.subr.mxu0 0.0
  %671 = vmatpush1.msra.mxu0 0.0
  %672 = vmatprep.mubr.f32.mxu0 0.0
  %673 = vmatmul.mubr.f32.gmra.mrb[0].mxu0 %v606
  %v674 = vpop.f32.mrb[0].mxu0
  %v675 = vadd.f32 0.0, %v674
  %v676 = vpop.f32.mrb[0].mxu0
  %v677 = vadd.f32 0.0, %v676
  %678 = vdwg.mxu0
  %v679 = vadd.f32 %v604, %v675
  %v680 = vadd.f32 %v605, %v677
  %v681 = vxor.u32 %v679, 2147483648
  %v682 = vmul.f32 %v681, 1.442695
  %v683 = vpow.pop %v682
  %v684 = vadd.f32 %v683, 1.0
  %v685 = vrcp.pop %v684
  %v686 = vmul.f32 1.0, %v685
  %v687 = vtanh.pop %v680
  %v688 = vxor.u32 %v680, 2147483648
  %v689 = vmul.f32 %v688, 1.442695
  %v690 = vpow.pop %v689
  %v691 = vadd.f32 %v690, 1.0
  %v692 = vrcp.pop %v691
  %v693 = vmul.f32 1.0, %v692
  %v694 = vmul.f32 %v686, %v583
  %v695 = vmul.f32 %v686, %v687
  %697 = vrot.lane.b32.xlu0 %v695, 64
  %v698 = vpop.permute.xlu0 %697
  %v700 = vadd.f32 %v694, %v698
  %v701 = vtanh.pop %v700
  %v702 = vmul.f32 %v693, %v701
  %704 = vrot.lane.b32.xlu0 %v702, 64
  %v705 = vpop.permute.xlu0 %704
  %s707 = scalar_lea.vmem %s4, 24
  %708 = vst.msk [vmem:[%s707] sm:$0xff] %vm355, %v705
  %s709 = scalar_lea.vmem %s4, 32
  %710 = vst.msk [vmem:[%s709] sm:$0xff] %vm358, %v705
  %v711 = vld [vmem:[%s601] sm:$0xff]
  %v712 = vld [vmem:[%s601 + $0x8] sm:$0xff]
  %v713 = vld [vmem:[%s596] sm:$0xff]
  %v714 = vld [vmem:[%s596 + $0x8] sm:$0xff]
  %v715 = vsel %vm238, %v711, %v713
  %v716 = vsel %vm239, %v712, %v714
  %v717 = vsel %vm252, %v705, 0
  %719 = vmatprep.subr.mxu0 %v196
  %720 = vmatpush1.msra.mxu0 %v195
  %721 = vmatprep.subr.mxu0 %v198
  %722 = vmatpush1.msra.mxu0 %v197
  %723 = vmatprep.subr.mxu0 %v200
  %724 = vmatpush1.msra.mxu0 %v199
  %725 = vmatprep.subr.mxu0 %v202
  %726 = vmatpush1.msra.mxu0 %v201
  %727 = vmatprep.subr.mxu0 %v204
  %728 = vmatpush1.msra.mxu0 %v203
  %729 = vmatprep.subr.mxu0 %v206
  %730 = vmatpush1.msra.mxu0 %v205
  %731 = vmatprep.subr.mxu0 %v208
  %732 = vmatpush1.msra.mxu0 %v207
  %733 = vmatprep.subr.mxu0 %v210
  %734 = vmatpush1.msra.mxu0 %v209
  %735 = vmatprep.subr.mxu0 0.0
  %736 = vmatpush1.msra.mxu0 0.0
  %737 = vmatprep.subr.mxu0 0.0
  %738 = vmatpush1.msra.mxu0 0.0
  %739 = vmatprep.subr.mxu0 0.0
  %740 = vmatpush1.msra.mxu0 0.0
  %741 = vmatprep.subr.mxu0 0.0
  %742 = vmatpush1.msra.mxu0 0.0
  %743 = vmatprep.subr.mxu0 0.0
  %744 = vmatpush1.msra.mxu0 0.0
  %745 = vmatprep.subr.mxu0 0.0
  %746 = vmatpush1.msra.mxu0 0.0
  %747 = vmatprep.subr.mxu0 0.0
  %748 = vmatpush1.msra.mxu0 0.0
  %749 = vmatprep.subr.mxu0 0.0
  %750 = vmatpush1.msra.mxu0 0.0
  %751 = vmatprep.subr.mxu0 0.0
  %752 = vmatpush1.msra.mxu0 0.0
  %753 = vmatprep.subr.mxu0 0.0
  %754 = vmatpush1.msra.mxu0 0.0
  %755 = vmatprep.subr.mxu0 0.0
  %756 = vmatpush1.msra.mxu0 0.0
  %757 = vmatprep.subr.mxu0 0.0
  %758 = vmatpush1.msra.mxu0 0.0
  %759 = vmatprep.subr.mxu0 0.0
  %760 = vmatpush1.msra.mxu0 0.0
  %761 = vmatprep.subr.mxu0 0.0
  %762 = vmatpush1.msra.mxu0 0.0
  %763 = vmatprep.subr.mxu0 0.0
  %764 = vmatpush1.msra.mxu0 0.0
  %765 = vmatprep.subr.mxu0 0.0
  %766 = vmatpush1.msra.mxu0 0.0
  %767 = vmatprep.subr.mxu0 0.0
  %768 = vmatpush1.msra.mxu0 0.0
  %769 = vmatprep.subr.mxu0 0.0
  %770 = vmatpush1.msra.mxu0 0.0
  %771 = vmatprep.subr.mxu0 0.0
  %772 = vmatpush1.msra.mxu0 0.0
  %773 = vmatprep.subr.mxu0 0.0
  %774 = vmatpush1.msra.mxu0 0.0
  %775 = vmatprep.subr.mxu0 0.0
  %776 = vmatpush1.msra.mxu0 0.0
  %777 = vmatprep.subr.mxu0 0.0
  %778 = vmatpush1.msra.mxu0 0.0
  %779 = vmatprep.subr.mxu0 0.0
  %780 = vmatpush1.msra.mxu0 0.0
  %781 = vmatprep.subr.mxu0 0.0
  %782 = vmatpush1.msra.mxu0 0.0
  %783 = vmatprep.mubr.f32.mxu0 0.0
  %784 = vmatmul.mubr.f32.gmra.mrb[0].mxu0 %v717
  %v785 = vpop.f32.mrb[0].mxu0
  %v786 = vadd.f32 0.0, %v785
  %v787 = vpop.f32.mrb[0].mxu0
  %v788 = vadd.f32 0.0, %v787
  %789 = vdwg.mxu0
  %v790 = vadd.f32 %v715, %v786
  %v791 = vadd.f32 %v716, %v788
  %v792 = vxor.u32 %v790, 2147483648
  %v793 = vmul.f32 %v792, 1.442695
  %v794 = vpow.pop %v793
  %v795 = vadd.f32 %v794, 1.0
  %v796 = vrcp.pop %v795
  %v797 = vmul.f32 1.0, %v796
  %v798 = vtanh.pop %v791
  %v799 = vxor.u32 %v791, 2147483648
  %v800 = vmul.f32 %v799, 1.442695
  %v801 = vpow.pop %v800
  %v802 = vadd.f32 %v801, 1.0
  %v803 = vrcp.pop %v802
  %v804 = vmul.f32 1.0, %v803
  %v805 = vmul.f32 %v797, %v700
  %v806 = vmul.f32 %v797, %v798
  %808 = vrot.lane.b32.xlu0 %v806, 64
  %v809 = vpop.permute.xlu0 %808
  %v811 = vadd.f32 %v805, %v809
  %v812 = vtanh.pop %v811
  %v813 = vmul.f32 %v804, %v812
  %815 = vrot.lane.b32.xlu0 %v813, 64
  %v816 = vpop.permute.xlu0 %815
  %818 = vst.msk [vmem:[%s709] sm:$0xff] %vm355, %v816
  %819 = vst.msk [vmem:[%s707] sm:$0xff] %vm358, %v816
  %v820 = vld [vmem:[%s484] sm:$0xff]
  %v821 = vld [vmem:[%s484 + $0x8] sm:$0xff]
  %v822 = vld [vmem:[%s479] sm:$0xff]
  %v823 = vld [vmem:[%s479 + $0x8] sm:$0xff]
  %v824 = vsel %vm238, %v820, %v822
  %v825 = vsel %vm239, %v821, %v823
  %v826 = vsel %vm252, %v816, 0
  %828 = vmatprep.subr.mxu0 %v196
  %829 = vmatpush1.msra.mxu0 %v195
  %830 = vmatprep.subr.mxu0 %v198
  %831 = vmatpush1.msra.mxu0 %v197
  %832 = vmatprep.subr.mxu0 %v200
  %833 = vmatpush1.msra.mxu0 %v199
  %834 = vmatprep.subr.mxu0 %v202
  %835 = vmatpush1.msra.mxu0 %v201
  %836 = vmatprep.subr.mxu0 %v204
  %837 = vmatpush1.msra.mxu0 %v203
  %838 = vmatprep.subr.mxu0 %v206
  %839 = vmatpush1.msra.mxu0 %v205
  %840 = vmatprep.subr.mxu0 %v208
  %841 = vmatpush1.msra.mxu0 %v207
  %842 = vmatprep.subr.mxu0 %v210
  %843 = vmatpush1.msra.mxu0 %v209
  %844 = vmatprep.subr.mxu0 0.0
  %845 = vmatpush1.msra.mxu0 0.0
  %846 = vmatprep.subr.mxu0 0.0
  %847 = vmatpush1.msra.mxu0 0.0
  %848 = vmatprep.subr.mxu0 0.0
  %849 = vmatpush1.msra.mxu0 0.0
  %850 = vmatprep.subr.mxu0 0.0
  %851 = vmatpush1.msra.mxu0 0.0
  %852 = vmatprep.subr.mxu0 0.0
  %853 = vmatpush1.msra.mxu0 0.0
  %854 = vmatprep.subr.mxu0 0.0
  %855 = vmatpush1.msra.mxu0 0.0
  %856 = vmatprep.subr.mxu0 0.0
  %857 = vmatpush1.msra.mxu0 0.0
  %858 = vmatprep.subr.mxu0 0.0
  %859 = vmatpush1.msra.mxu0 0.0
  %860 = vmatprep.subr.mxu0 0.0
  %861 = vmatpush1.msra.mxu0 0.0
  %862 = vmatprep.subr.mxu0 0.0
  %863 = vmatpush1.msra.mxu0 0.0
  %864 = vmatprep.subr.mxu0 0.0
  %865 = vmatpush1.msra.mxu0 0.0
  %866 = vmatprep.subr.mxu0 0.0
  %867 = vmatpush1.msra.mxu0 0.0
  %868 = vmatprep.subr.mxu0 0.0
  %869 = vmatpush1.msra.mxu0 0.0
  %870 = vmatprep.subr.mxu0 0.0
  %871 = vmatpush1.msra.mxu0 0.0
  %872 = vmatprep.subr.mxu0 0.0
  %873 = vmatpush1.msra.mxu0 0.0
  %874 = vmatprep.subr.mxu0 0.0
  %875 = vmatpush1.msra.mxu0 0.0
  %876 = vmatprep.subr.mxu0 0.0
  %877 = vmatpush1.msra.mxu0 0.0
  %878 = vmatprep.subr.mxu0 0.0
  %879 = vmatpush1.msra.mxu0 0.0
  %880 = vmatprep.subr.mxu0 0.0
  %881 = vmatpush1.msra.mxu0 0.0
  %882 = vmatprep.subr.mxu0 0.0
  %883 = vmatpush1.msra.mxu0 0.0
  %884 = vmatprep.subr.mxu0 0.0
  %885 = vmatpush1.msra.mxu0 0.0
  %886 = vmatprep.subr.mxu0 0.0
  %887 = vmatpush1.msra.mxu0 0.0
  %888 = vmatprep.subr.mxu0 0.0
  %889 = vmatpush1.msra.mxu0 0.0
  %890 = vmatprep.subr.mxu0 0.0
  %891 = vmatpush1.msra.mxu0 0.0
  %892 = vmatprep.mubr.f32.mxu0 0.0
  %893 = vmatmul.mubr.f32.gmra.mrb[0].mxu0 %v826
  %v894 = vpop.f32.mrb[0].mxu0
  %v895 = vadd.f32 0.0, %v894
  %v896 = vpop.f32.mrb[0].mxu0
  %v897 = vadd.f32 0.0, %v896
  %898 = vdwg.mxu0
  %v899 = vadd.f32 %v824, %v895
  %v900 = vadd.f32 %v825, %v897
  %v901 = vxor.u32 %v899, 2147483648
  %v902 = vmul.f32 %v901, 1.442695
  %v903 = vpow.pop %v902
  %v904 = vadd.f32 %v903, 1.0
  %v905 = vrcp.pop %v904
  %v906 = vmul.f32 1.0, %v905
  %v907 = vtanh.pop %v900
  %v908 = vxor.u32 %v900, 2147483648
  %v909 = vmul.f32 %v908, 1.442695
  %v910 = vpow.pop %v909
  %v911 = vadd.f32 %v910, 1.0
  %v912 = vrcp.pop %v911
  %v913 = vmul.f32 1.0, %v912
  %v914 = vmul.f32 %v906, %v811
  %v915 = vmul.f32 %v906, %v907
  %917 = vrot.lane.b32.xlu0 %v915, 64
  %v918 = vpop.permute.xlu0 %917
  %v920 = vadd.f32 %v914, %v918
  %v921 = vtanh.pop %v920
  %v922 = vmul.f32 %v913, %v921
  %924 = vrot.lane.b32.xlu0 %v922, 64
  %v925 = vpop.permute.xlu0 %924
  %927 = vst.msk [vmem:[%s592] sm:$0xff] %vm355, %v925
  %928 = vst.msk [vmem:[%s590] sm:$0xff] %vm358, %v925
  %v929 = vld [vmem:[%s367] sm:$0xff]
  %v930 = vld [vmem:[%s367 + $0x8] sm:$0xff]
  %v931 = vld [vmem:[%s362] sm:$0xff]
  %v932 = vld [vmem:[%s362 + $0x8] sm:$0xff]
  %v933 = vsel %vm238, %v929, %v931
  %v934 = vsel %vm239, %v930, %v932
  %v935 = vsel %vm252, %v925, 0
  %937 = vmatprep.subr.mxu0 %v196
  %938 = vmatpush1.msra.mxu0 %v195
  %939 = vmatprep.subr.mxu0 %v198
  %940 = vmatpush1.msra.mxu0 %v197
  %941 = vmatprep.subr.mxu0 %v200
  %942 = vmatpush1.msra.mxu0 %v199
  %943 = vmatprep.subr.mxu0 %v202
  %944 = vmatpush1.msra.mxu0 %v201
  %945 = vmatprep.subr.mxu0 %v204
  %946 = vmatpush1.msra.mxu0 %v203
  %947 = vmatprep.subr.mxu0 %v206
  %948 = vmatpush1.msra.mxu0 %v205
  %949 = vmatprep.subr.mxu0 %v208
  %950 = vmatpush1.msra.mxu0 %v207
  %951 = vmatprep.subr.mxu0 %v210
  %952 = vmatpush1.msra.mxu0 %v209
  %953 = vmatprep.subr.mxu0 0.0
  %954 = vmatpush1.msra.mxu0 0.0
  %955 = vmatprep.subr.mxu0 0.0
  %956 = vmatpush1.msra.mxu0 0.0
  %957 = vmatprep.subr.mxu0 0.0
  %958 = vmatpush1.msra.mxu0 0.0
  %959 = vmatprep.subr.mxu0 0.0
  %960 = vmatpush1.msra.mxu0 0.0
  %961 = vmatprep.subr.mxu0 0.0
  %962 = vmatpush1.msra.mxu0 0.0
  %963 = vmatprep.subr.mxu0 0.0
  %964 = vmatpush1.msra.mxu0 0.0
  %965 = vmatprep.subr.mxu0 0.0
  %966 = vmatpush1.msra.mxu0 0.0
  %967 = vmatprep.subr.mxu0 0.0
  %968 = vmatpush1.msra.mxu0 0.0
  %969 = vmatprep.subr.mxu0 0.0
  %970 = vmatpush1.msra.mxu0 0.0
  %971 = vmatprep.subr.mxu0 0.0
  %972 = vmatpush1.msra.mxu0 0.0
  %973 = vmatprep.subr.mxu0 0.0
  %974 = vmatpush1.msra.mxu0 0.0
  %975 = vmatprep.subr.mxu0 0.0
  %976 = vmatpush1.msra.mxu0 0.0
  %977 = vmatprep.subr.mxu0 0.0
  %978 = vmatpush1.msra.mxu0 0.0
  %979 = vmatprep.subr.mxu0 0.0
  %980 = vmatpush1.msra.mxu0 0.0
  %981 = vmatprep.subr.mxu0 0.0
  %982 = vmatpush1.msra.mxu0 0.0
  %983 = vmatprep.subr.mxu0 0.0
  %984 = vmatpush1.msra.mxu0 0.0
  %985 = vmatprep.subr.mxu0 0.0
  %986 = vmatpush1.msra.mxu0 0.0
  %987 = vmatprep.subr.mxu0 0.0
  %988 = vmatpush1.msra.mxu0 0.0
  %989 = vmatprep.subr.mxu0 0.0
  %990 = vmatpush1.msra.mxu0 0.0
  %991 = vmatprep.subr.mxu0 0.0
  %992 = vmatpush1.msra.mxu0 0.0
  %993 = vmatprep.subr.mxu0 0.0
  %994 = vmatpush1.msra.mxu0 0.0
  %995 = vmatprep.subr.mxu0 0.0
  %996 = vmatpush1.msra.mxu0 0.0
  %997 = vmatprep.subr.mxu0 0.0
  %998 = vmatpush1.msra.mxu0 0.0
  %999 = vmatprep.subr.mxu0 0.0
  %1000 = vmatpush1.msra.mxu0 0.0
  %1001 = vmatprep.mubr.f32.mxu0 0.0
  %1002 = vmatmul.mubr.f32.gmra.mrb[0].mxu0 %v935
  %v1003 = vpop.f32.mrb[0].mxu0
  %v1004 = vadd.f32 0.0, %v1003
  %v1005 = vpop.f32.mrb[0].mxu0
  %v1006 = vadd.f32 0.0, %v1005
  %1007 = vdwg.mxu0
  %v1008 = vadd.f32 %v933, %v1004
  %v1009 = vadd.f32 %v934, %v1006
  %v1010 = vxor.u32 %v1008, 2147483648
  %v1011 = vmul.f32 %v1010, 1.442695
  %v1012 = vpow.pop %v1011
  %v1013 = vadd.f32 %v1012, 1.0
  %v1014 = vrcp.pop %v1013
  %v1015 = vmul.f32 1.0, %v1014
  %v1016 = vtanh.pop %v1009
  %v1017 = vxor.u32 %v1009, 2147483648
  %v1018 = vmul.f32 %v1017, 1.442695
  %v1019 = vpow.pop %v1018
  %v1020 = vadd.f32 %v1019, 1.0
  %v1021 = vrcp.pop %v1020
  %v1022 = vmul.f32 1.0, %v1021
  %v1023 = vmul.f32 %v1015, %v920
  %v1024 = vmul.f32 %v1015, %v1016
  %1026 = vrot.lane.b32.xlu0 %v1024, 64
  %v1027 = vpop.permute.xlu0 %1026
  %v1029 = vadd.f32 %v1023, %v1027
  %v1030 = vtanh.pop %v1029
  %v1031 = vmul.f32 %v1022, %v1030
  %1033 = vrot.lane.b32.xlu0 %v1031, 64
  %v1034 = vpop.permute.xlu0 %1033
  %1036 = vst.msk [vmem:[%s475] sm:$0xff] %vm355, %v1034
  %1037 = vst.msk [vmem:[%s473] sm:$0xff] %vm358, %v1034
  %v1038 = vld [vmem:[%s247] sm:$0xff]
  %v1039 = vld [vmem:[%s247 + $0x8] sm:$0xff]
  %v1040 = vld [vmem:[%s242] sm:$0xff]
  %v1041 = vld [vmem:[%s242 + $0x8] sm:$0xff]
  %v1042 = vsel %vm238, %v1038, %v1040
  %v1043 = vsel %vm239, %v1039, %v1041
  %v1044 = vsel %vm252, %v1034, 0
  %1046 = vmatprep.subr.mxu0 %v196
  %1047 = vmatpush1.msra.mxu0 %v195
  %1048 = vmatprep.subr.mxu0 %v198
  %1049 = vmatpush1.msra.mxu0 %v197
  %1050 = vmatprep.subr.mxu0 %v200
  %1051 = vmatpush1.msra.mxu0 %v199
  %1052 = vmatprep.subr.mxu0 %v202
  %1053 = vmatpush1.msra.mxu0 %v201
  %1054 = vmatprep.subr.mxu0 %v204
  %1055 = vmatpush1.msra.mxu0 %v203
  %1056 = vmatprep.subr.mxu0 %v206
  %1057 = vmatpush1.msra.mxu0 %v205
  %1058 = vmatprep.subr.mxu0 %v208
  %1059 = vmatpush1.msra.mxu0 %v207
  %1060 = vmatprep.subr.mxu0 %v210
  %1061 = vmatpush1.msra.mxu0 %v209
  %1062 = vmatprep.subr.mxu0 0.0
  %1063 = vmatpush1.msra.mxu0 0.0
  %1064 = vmatprep.subr.mxu0 0.0
  %1065 = vmatpush1.msra.mxu0 0.0
  %1066 = vmatprep.subr.mxu0 0.0
  %1067 = vmatpush1.msra.mxu0 0.0
  %1068 = vmatprep.subr.mxu0 0.0
  %1069 = vmatpush1.msra.mxu0 0.0
  %1070 = vmatprep.subr.mxu0 0.0
  %1071 = vmatpush1.msra.mxu0 0.0
  %1072 = vmatprep.subr.mxu0 0.0
  %1073 = vmatpush1.msra.mxu0 0.0
  %1074 = vmatprep.subr.mxu0 0.0
  %1075 = vmatpush1.msra.mxu0 0.0
  %1076 = vmatprep.subr.mxu0 0.0
  %1077 = vmatpush1.msra.mxu0 0.0
  %1078 = vmatprep.subr.mxu0 0.0
  %1079 = vmatpush1.msra.mxu0 0.0
  %1080 = vmatprep.subr.mxu0 0.0
  %1081 = vmatpush1.msra.mxu0 0.0
  %1082 = vmatprep.subr.mxu0 0.0
  %1083 = vmatpush1.msra.mxu0 0.0
  %1084 = vmatprep.subr.mxu0 0.0
  %1085 = vmatpush1.msra.mxu0 0.0
  %1086 = vmatprep.subr.mxu0 0.0
  %1087 = vmatpush1.msra.mxu0 0.0
  %1088 = vmatprep.subr.mxu0 0.0
  %1089 = vmatpush1.msra.mxu0 0.0
  %1090 = vmatprep.subr.mxu0 0.0
  %1091 = vmatpush1.msra.mxu0 0.0
  %1092 = vmatprep.subr.mxu0 0.0
  %1093 = vmatpush1.msra.mxu0 0.0
  %1094 = vmatprep.subr.mxu0 0.0
  %1095 = vmatpush1.msra.mxu0 0.0
  %1096 = vmatprep.subr.mxu0 0.0
  %1097 = vmatpush1.msra.mxu0 0.0
  %1098 = vmatprep.subr.mxu0 0.0
  %1099 = vmatpush1.msra.mxu0 0.0
  %1100 = vmatprep.subr.mxu0 0.0
  %1101 = vmatpush1.msra.mxu0 0.0
  %1102 = vmatprep.subr.mxu0 0.0
  %1103 = vmatpush1.msra.mxu0 0.0
  %1104 = vmatprep.subr.mxu0 0.0
  %1105 = vmatpush1.msra.mxu0 0.0
  %1106 = vmatprep.subr.mxu0 0.0
  %1107 = vmatpush1.msra.mxu0 0.0
  %1108 = vmatprep.subr.mxu0 0.0
  %1109 = vmatpush1.msra.mxu0 0.0
  %1110 = vmatprep.mubr.f32.mxu0 0.0
  %1111 = vmatmul.mubr.f32.gmra.mrb[0].mxu0 %v1044
  %v1112 = vpop.f32.mrb[0].mxu0
  %v1113 = vadd.f32 0.0, %v1112
  %v1114 = vpop.f32.mrb[0].mxu0
  %v1115 = vadd.f32 0.0, %v1114
  %1116 = vdwg.mxu0
  %v1117 = vadd.f32 %v1042, %v1113
  %v1118 = vadd.f32 %v1043, %v1115
  %v1119 = vxor.u32 %v1117, 2147483648
  %v1120 = vmul.f32 %v1119, 1.442695
  %v1121 = vpow.pop %v1120
  %v1122 = vadd.f32 %v1121, 1.0
  %v1123 = vrcp.pop %v1122
  %v1124 = vmul.f32 1.0, %v1123
  %v1125 = vtanh.pop %v1118
  %v1126 = vxor.u32 %v1118, 2147483648
  %v1127 = vmul.f32 %v1126, 1.442695
  %v1128 = vpow.pop %v1127
  %v1129 = vadd.f32 %v1128, 1.0
  %v1130 = vrcp.pop %v1129
  %v1131 = vmul.f32 1.0, %v1130
  %v1132 = vmul.f32 %v1124, %v1029
  %v1133 = vmul.f32 %v1124, %v1125
  %1135 = vrot.lane.b32.xlu0 %v1133, 64
  %v1136 = vpop.permute.xlu0 %1135
  %v1138 = vadd.f32 %v1132, %v1136
  %v1139 = vtanh.pop %v1138
  %v1140 = vmul.f32 %v1131, %v1139
  %1142 = vrot.lane.b32.xlu0 %v1140, 64
  %v1143 = vpop.permute.xlu0 %1142
  %1145 = vst.msk [vmem:[%s357] sm:$0xff] %vm355, %v1143
  %1146 = vst.msk [vmem:[%s4] sm:$0xff] %vm358, %v1143
  // Predicated region
  $region18: #{bilstm_block_forward.1} parent=0 // pred_check
    _
  $region19: #{bilstm_block_forward.1} parent=0 // pred_check_branch
    %1148 = sbr.rel (0) target = $region21
  $region20: #{bilstm_block_forward.1} parent=0 // pred_region
    _
  $region21: #{bilstm_block_forward.1} parent=0 // pred_fallthru
    _
  // Predicated region
  $region22: #{bilstm_block_forward.1} parent=0 // pred_check
    _
  $region23: #{bilstm_block_forward.1} parent=0 // pred_check_branch
    %1150 = sbr.rel (0) target = $region25
  $region24: #{bilstm_block_forward.1} parent=0 // pred_region
    _
  $region25: #{bilstm_block_forward.1} parent=0 // pred_fallthru
    _

</llo_original>
